<compile_context>
chip_gen: v7x
topology: tpu7x:2x2x1
jax: 0.10.0
libtpu: 0.0.40
codegen_flags: <defaults>
</compile_context>

<pallas_src>
import functools

import jax
import jax.numpy as jnp
from jax import lax
from jax.experimental import pallas as pl
from jax.experimental.pallas import tpu as pltpu


# ------------------------------ fused kernel ------------------------------- #

def _fused_attn_kernel(x_ref, qkv_w_ref, qkv_b_ref, proj_w_ref, proj_b_ref,
                       o_ref, *, num_heads, scale, mode, hw, block_b):
    # Hoist grid-resident weights (loaded once per grid step, reused across bb).
    qkv_w = qkv_w_ref[...]                      # (C, 3C)
    qkv_b = qkv_b_ref[...]                      # (1, 3C)
    proj_w = proj_w_ref[...]                    # (C, C)
    proj_b = proj_b_ref[...]                    # (1, C)

    _, N, C = x_ref.shape
    D = C // num_heads

    if mode == "cls_and_rest":
        # Row 0 (cls) attends over all keys; rows 1.. attend only over rows 1..
        # (additive mask reproduces the reference's two separate softmaxes).
        row = lax.broadcasted_iota(jnp.int32, (N, N), 0)
        col = lax.broadcasted_iota(jnp.int32, (N, N), 1)
        cls_bias = jnp.where((row > 0) & (col == 0), -1e30, 0.0).astype(jnp.float32)
    else:
        cls_bias = None

    def mha(qr, kr, vr, *, bias=None, use_sigmoid=False):
        # qr: (Nq, C), kr/vr: (Nk, C) -> (Nq, C), heads concatenated on lanes.
        outs = []
        for h in range(num_heads):              # static unroll (num_heads small)
            lo = h * D
            qh, kh, vh = qr[:, lo:lo + D], kr[:, lo:lo + D], vr[:, lo:lo + D]
            # Contract head dim directly: no k transpose materialized.
            s = lax.dot_general(qh, kh, (((1,), (1,)), ((), ())),
                                preferred_element_type=jnp.float32)
            if bias is not None:
                s = s + bias
            if use_sigmoid:
                p = jax.nn.sigmoid(s)
            else:
                m = jnp.max(s, axis=-1, keepdims=True)
                e = jnp.exp(s - m)
                denom = jnp.sum(e, axis=-1, keepdims=True)
                p = e * pl.reciprocal(denom, approx=True)
            outs.append(jnp.dot(p, vh, preferred_element_type=jnp.float32))
        return jnp.concatenate(outs, axis=-1)   # (Nq, C) lane-dense, head order

    def proj(y):
        return jnp.dot(y, proj_w, preferred_element_type=jnp.float32) + proj_b

    for b in range(block_b):                    # static unroll over batch block
        x = x_ref[b]                            # (N, C), input dtype
        # Fused QKV projection (MXU, f32 accumulation).
        qkv = jnp.dot(x, qkv_w, preferred_element_type=jnp.float32) + qkv_b
        q = qkv[:, :C] * scale                  # fold scale into q
        k = qkv[:, C:2 * C]
        v = qkv[:, 2 * C:]

        if mode == "self_attn":
            # Plain self-attention over all N tokens.
            o_ref[b] = proj(mha(q, k, v)).astype(o_ref.dtype)
        elif mode == "cls_and_rest":
            o_ref[b] = proj(mha(q, k, v, bias=cls_bias)).astype(o_ref.dtype)
        elif mode == "query_readout":
            # First hw rows attend over all keys; remaining rows pass through x.
            y_q = proj(mha(q[:hw], k, v))       # (hw, C)
            o_ref[b, :hw, :] = y_q.astype(o_ref.dtype)
            o_ref[b, hw:, :] = x[hw:, :].astype(o_ref.dtype)
        elif mode == "enhance_query":
            # Rows 1.. attend (sigmoid, no softmax) over the cls key only;
            # row 0 (cls token) passes through unchanged.
            y = proj(mha(q[1:], k[:1], v[:1], use_sigmoid=True))   # (hw, C)
            o_ref[b, 0:1, :] = x[0:1, :].astype(o_ref.dtype)
            o_ref[b, 1:, :] = y.astype(o_ref.dtype)
        else:
            raise NotImplementedError(mode)


def _pick_batch_block(B, N, C, itemsize, vmem_budget=24 << 20):
    """Largest divisor of B (<= 8) whose double-buffered blocks fit the budget."""
    weights = (C * 3 * C + 3 * C + C * C + C) * 4
    best = 1
    for d in range(1, min(B, 8) + 1):
        if B % d != 0:
            continue
        blocks = 4 * d * N * C * itemsize        # 2x in + 2x out double-buffer
        if weights + blocks <= vmem_budget:
            best = d
    return best


def _fused_attention(x, params, *, num_heads, mode, hw):
    B, N, C = x.shape
    scale = (C // num_heads) ** -0.5
    bb = _pick_batch_block(B, N, C, x.dtype.itemsize)
    kern = functools.partial(_fused_attn_kernel, num_heads=num_heads,
                             scale=scale, mode=mode, hw=hw, block_b=bb)
    return pl.pallas_call(
        kern,
        out_shape=jax.ShapeDtypeStruct((B, N, C), x.dtype),
        grid=(B // bb,),
        in_specs=[
            pl.BlockSpec((bb, N, C), lambda i: (i, 0, 0)),     # x batch block
            pl.BlockSpec((C, 3 * C), lambda i: (0, 0)),        # qkv_w (resident)
            pl.BlockSpec((1, 3 * C), lambda i: (0, 0)),        # qkv_b
            pl.BlockSpec((C, C), lambda i: (0, 0)),            # proj_w
            pl.BlockSpec((1, C), lambda i: (0, 0)),            # proj_b
        ],
        out_specs=pl.BlockSpec((bb, N, C), lambda i: (i, 0, 0)),
        compiler_params=pltpu.CompilerParams(
            dimension_semantics=("parallel",)),
    )(x, params["qkv_w"], params["qkv_b"], params["proj_w"], params["proj_b"])


# ------------------------------ module glue -------------------------------- #

def init_params(key, dim, qkv_bias=False):
    k1, k2, k3, k4 = jax.random.split(key, 4)
    return {
        "qkv_w": 0.02 * jax.random.normal(k1, (dim, 3 * dim), jnp.float32),
        "qkv_b": (0.02 * jax.random.normal(k2, (1, 3 * dim), jnp.float32)
                  if qkv_bias else jnp.zeros((1, 3 * dim), jnp.float32)),
        "proj_w": 0.02 * jax.random.normal(k3, (dim, dim), jnp.float32),
        "proj_b": 0.02 * jax.random.normal(k4, (1, dim), jnp.float32),
    }


def mixattn_memory_clsToken(params, x, hw, backbone_update_clsToken, *, num_heads):
    B, N, C = x.shape
    if backbone_update_clsToken:
        assert N == 1 + hw
        return _fused_attention(x, params, num_heads=num_heads,
                                mode="cls_and_rest", hw=hw)
    else:
        assert N == hw
        return _fused_attention(x, params, num_heads=num_heads,
                                mode="self_attn", hw=hw)


def mixattn_memory_query(params, x, T, hw, *, num_heads):
    B, N, C = x.shape
    assert N == hw + T * hw
    return _fused_attention(x, params, num_heads=num_heads,
                            mode="query_readout", hw=hw)


def enhance_query(params, x, hw, *, num_heads):
    B, N, C = x.shape
    assert N == 1 + hw
    return _fused_attention(x, params, num_heads=num_heads,
                            mode="enhance_query", hw=hw)


def mixattn_feature_clstoken(params, x, hw, *, num_heads):
    B, N, C = x.shape
    assert N == 1 + hw
    return _fused_attention(x, params, num_heads=num_heads,
                            mode="cls_and_rest", hw=hw)


def attention_forward(params, mode, *args, num_heads, **kwargs):
    if mode == 'mixattn_memory_clsToken':
        return mixattn_memory_clsToken(params, *args, num_heads=num_heads, **kwargs)
    elif mode == 'mixattn_memory_query':
        return mixattn_memory_query(params, *args, num_heads=num_heads, **kwargs)
    elif mode == 'enhance_query':
        return enhance_query(params, *args, num_heads=num_heads, **kwargs)
    elif mode == 'mixattn_feature_clstoken':
        return mixattn_feature_clstoken(params, *args, num_heads=num_heads, **kwargs)
    else:
        raise NotImplementedError(mode)


# ---------------------------------- main ----------------------------------- #

if __name__ == "__main__":
    key = jax.random.PRNGKey(0)
    dim, num_heads = 32, 4
    hw, T, B = 8, 2, 2

    kp, kx1, kx2, kx3, kx4 = jax.random.split(key, 5)
    params = init_params(kp, dim, qkv_bias=False)

    # mode 'mixattn_memory_clsToken' (cls_token + hw memory tokens, update cls)
    x1 = jax.random.normal(kx1, (B, 1 + hw, dim), jnp.float32)
    out1 = attention_forward(params, 'mixattn_memory_clsToken', x1, hw, True,
                             num_heads=num_heads)
    jax.block_until_ready(out1)
    assert out1.shape == (B, 1 + hw, dim)

    # mode 'mixattn_memory_clsToken' (memory-only self-attention, no cls update)
    x1b = jax.random.normal(kx2, (B, hw, dim), jnp.float32)
    out1b = attention_forward(params, 'mixattn_memory_clsToken', x1b, hw, False,
                              num_heads=num_heads)
    jax.block_until_ready(out1b)
    assert out1b.shape == (B, hw, dim)

    # mode 'mixattn_memory_query' (hw query tokens + T*hw memory tokens)
    x2 = jax.random.normal(kx3, (B, hw + T * hw, dim), jnp.float32)
    out2 = attention_forward(params, 'mixattn_memory_query', x2, T, hw,
                             num_heads=num_heads)
    jax.block_until_ready(out2)
    assert out2.shape == (B, hw + T * hw, dim)

    # mode 'enhance_query' (cls_token + hw query tokens, sigmoid attention)
    x3 = jax.random.normal(kx4, (B, 1 + hw, dim), jnp.float32)
    out3 = attention_forward(params, 'enhance_query', x3, hw,
                             num_heads=num_heads)
    jax.block_until_ready(out3)
    assert out3.shape == (B, 1 + hw, dim)

    # mode 'mixattn_feature_clstoken' (same fused masked-attention path)
    out4 = attention_forward(params, 'mixattn_feature_clstoken', x3, hw,
                             num_heads=num_heads)
    jax.block_until_ready(out4)
    assert out4.shape == (B, 1 + hw, dim)

    print("KERNEL_OK")
</pallas_src>

<mosaic_0001>
module attributes {stable_mosaic.version = 11 : i64} {
  func.func @_fused_attn_kernel(%arg0: i32, %arg1: memref<2x9x32xf32, #tpu.memory_space<vmem>>, %arg2: memref<32x96xf32, #tpu.memory_space<vmem>>, %arg3: memref<1x96xf32, #tpu.memory_space<vmem>>, %arg4: memref<32x32xf32, #tpu.memory_space<vmem>>, %arg5: memref<1x32xf32, #tpu.memory_space<vmem>>, %arg6: memref<2x9x32xf32, #tpu.memory_space<vmem>>) attributes {dimension_semantics = [#tpu.dimension_semantics<parallel>], iteration_bounds = array<i64: 1>, scalar_prefetch = 0 : i64, scratch_operands = 0 : i64, tpu.core_type = #tpu.core_type<tc>, window_params = [{transform_indices = @transform_0, window_bounds = array<i64: 2, 9, 32>}, {pipeline_mode = #tpu.pipeline_mode<synchronous>, transform_indices = @transform_1, window_bounds = array<i64: 32, 96>}, {pipeline_mode = #tpu.pipeline_mode<synchronous>, transform_indices = @transform_2, window_bounds = array<i64: 1, 96>}, {pipeline_mode = #tpu.pipeline_mode<synchronous>, transform_indices = @transform_3, window_bounds = array<i64: 32, 32>}, {pipeline_mode = #tpu.pipeline_mode<synchronous>, transform_indices = @transform_4, window_bounds = array<i64: 1, 32>}, {transform_indices = @transform_5, window_bounds = array<i64: 2, 9, 32>}]} {
    %c0 = arith.constant 0 : index
    %c0_0 = arith.constant 0 : index
    %0 = vector.load %arg2[%c0, %c0_0] : memref<32x96xf32, #tpu.memory_space<vmem>>, vector<32x96xf32>
    %c0_1 = arith.constant 0 : index
    %c0_2 = arith.constant 0 : index
    %1 = vector.load %arg3[%c0_1, %c0_2] : memref<1x96xf32, #tpu.memory_space<vmem>>, vector<1x96xf32>
    %c0_3 = arith.constant 0 : index
    %c0_4 = arith.constant 0 : index
    %2 = vector.load %arg4[%c0_3, %c0_4] : memref<32x32xf32, #tpu.memory_space<vmem>>, vector<32x32xf32>
    %c0_5 = arith.constant 0 : index
    %c0_6 = arith.constant 0 : index
    %3 = vector.load %arg5[%c0_5, %c0_6] : memref<1x32xf32, #tpu.memory_space<vmem>>, vector<1x32xf32>
    %4 = tpu.iota {dimensions = array<i32: 0>} : vector<9x9xi32>
    %5 = tpu.iota {dimensions = array<i32: 1>} : vector<9x9xi32>
    %c0_i32 = arith.constant 0 : i32
    %6 = vector.broadcast %c0_i32 : i32 to vector<9x9xi32>
    %7 = arith.cmpi sgt, %4, %6 : vector<9x9xi32>
    %c0_i32_7 = arith.constant 0 : i32
    %8 = vector.broadcast %c0_i32_7 : i32 to vector<9x9xi32>
    %9 = arith.cmpi eq, %5, %8 : vector<9x9xi32>
    %10 = arith.andi %7, %9 : vector<9x9xi1>
    %cst = arith.constant -1.000000e+30 : f32
    %cst_8 = arith.constant 0.000000e+00 : f32
    %11 = vector.broadcast %cst : f32 to vector<9x9xf32>
    %12 = vector.broadcast %cst_8 : f32 to vector<9x9xf32>
    %13 = arith.select %10, %11, %12 : vector<9x9xi1>, vector<9x9xf32>
    %c0_9 = arith.constant 0 : index
    %c0_10 = arith.constant 0 : index
    %c0_11 = arith.constant 0 : index
    %14 = vector.load %arg1[%c0_9, %c0_10, %c0_11] : memref<2x9x32xf32, #tpu.memory_space<vmem>>, vector<1x9x32xf32>
    %15 = vector.shape_cast %14 : vector<1x9x32xf32> to vector<9x32xf32>
    %cst_12 = arith.constant dense<0.000000e+00> : vector<9x96xf32>
    %16 = tpu.matmul %15, %0, %cst_12 {dimension_numbers = #tpu.dot_dimension_numbers<[1], [0], [0], [1], [0, 0, 1, 1], [], []>} : vector<9x32xf32>, vector<32x96xf32>, vector<9x96xf32> -> vector<9x96xf32>
    %17 = vector.broadcast %1 : vector<1x96xf32> to vector<9x96xf32>
    %18 = arith.addf %16, %17 : vector<9x96xf32>
    %19 = vector.extract_strided_slice %18 {offsets = [0, 0], sizes = [9, 32], strides = [1, 1]} : vector<9x96xf32> to vector<9x32xf32>
    %cst_13 = arith.constant 0.353553385 : f32
    %20 = vector.broadcast %cst_13 : f32 to vector<9x32xf32>
    %21 = arith.mulf %19, %20 : vector<9x32xf32>
    %22 = vector.extract_strided_slice %18 {offsets = [0, 32], sizes = [9, 32], strides = [1, 1]} : vector<9x96xf32> to vector<9x32xf32>
    %23 = vector.extract_strided_slice %18 {offsets = [0, 64], sizes = [9, 32], strides = [1, 1]} : vector<9x96xf32> to vector<9x32xf32>
    %24 = vector.extract_strided_slice %21 {offsets = [0, 0], sizes = [9, 8], strides = [1, 1]} : vector<9x32xf32> to vector<9x8xf32>
    %25 = vector.extract_strided_slice %22 {offsets = [0, 0], sizes = [9, 8], strides = [1, 1]} : vector<9x32xf32> to vector<9x8xf32>
    %26 = vector.extract_strided_slice %23 {offsets = [0, 0], sizes = [9, 8], strides = [1, 1]} : vector<9x32xf32> to vector<9x8xf32>
    %cst_14 = arith.constant dense<0.000000e+00> : vector<9x9xf32>
    %27 = tpu.matmul %24, %25, %cst_14 {dimension_numbers = #tpu.dot_dimension_numbers<[1], [1], [0], [0], [0, 0, 1, 0], [], []>} : vector<9x8xf32>, vector<9x8xf32>, vector<9x9xf32> -> vector<9x9xf32>
    %28 = arith.addf %27, %13 : vector<9x9xf32>
    %cst_15 = arith.constant dense<0xFF800000> : vector<9xf32>
    %29 = vector.multi_reduction <maximumf>, %28, %cst_15 [1] : vector<9x9xf32> to vector<9xf32>
    %30 = vector.shape_cast %29 : vector<9xf32> to vector<9x1xf32>
    %31 = vector.broadcast %30 : vector<9x1xf32> to vector<9x9xf32>
    %32 = arith.subf %28, %31 : vector<9x9xf32>
    %33 = math.exp %32 : vector<9x9xf32>
    %cst_16 = arith.constant dense<0.000000e+00> : vector<9xf32>
    %34 = vector.multi_reduction <add>, %33, %cst_16 [1] : vector<9x9xf32> to vector<9xf32>
    %35 = vector.shape_cast %34 : vector<9xf32> to vector<9x1xf32>
    %36 = tpu.reciprocal %35 {approx = true} : vector<9x1xf32> -> vector<9x1xf32>
    %37 = vector.broadcast %36 : vector<9x1xf32> to vector<9x9xf32>
    %38 = arith.mulf %33, %37 : vector<9x9xf32>
    %cst_17 = arith.constant dense<0.000000e+00> : vector<9x8xf32>
    %39 = tpu.matmul %38, %26, %cst_17 {dimension_numbers = #tpu.dot_dimension_numbers<[1], [0], [0], [1], [0, 0, 1, 1], [], []>} : vector<9x9xf32>, vector<9x8xf32>, vector<9x8xf32> -> vector<9x8xf32>
    %40 = vector.extract_strided_slice %21 {offsets = [0, 8], sizes = [9, 8], strides = [1, 1]} : vector<9x32xf32> to vector<9x8xf32>
    %41 = vector.extract_strided_slice %22 {offsets = [0, 8], sizes = [9, 8], strides = [1, 1]} : vector<9x32xf32> to vector<9x8xf32>
    %42 = vector.extract_strided_slice %23 {offsets = [0, 8], sizes = [9, 8], strides = [1, 1]} : vector<9x32xf32> to vector<9x8xf32>
    %cst_18 = arith.constant dense<0.000000e+00> : vector<9x9xf32>
    %43 = tpu.matmul %40, %41, %cst_18 {dimension_numbers = #tpu.dot_dimension_numbers<[1], [1], [0], [0], [0, 0, 1, 0], [], []>} : vector<9x8xf32>, vector<9x8xf32>, vector<9x9xf32> -> vector<9x9xf32>
    %44 = arith.addf %43, %13 : vector<9x9xf32>
    %cst_19 = arith.constant dense<0xFF800000> : vector<9xf32>
    %45 = vector.multi_reduction <maximumf>, %44, %cst_19 [1] : vector<9x9xf32> to vector<9xf32>
    %46 = vector.shape_cast %45 : vector<9xf32> to vector<9x1xf32>
    %47 = vector.broadcast %46 : vector<9x1xf32> to vector<9x9xf32>
    %48 = arith.subf %44, %47 : vector<9x9xf32>
    %49 = math.exp %48 : vector<9x9xf32>
    %cst_20 = arith.constant dense<0.000000e+00> : vector<9xf32>
    %50 = vector.multi_reduction <add>, %49, %cst_20 [1] : vector<9x9xf32> to vector<9xf32>
    %51 = vector.shape_cast %50 : vector<9xf32> to vector<9x1xf32>
    %52 = tpu.reciprocal %51 {approx = true} : vector<9x1xf32> -> vector<9x1xf32>
    %53 = vector.broadcast %52 : vector<9x1xf32> to vector<9x9xf32>
    %54 = arith.mulf %49, %53 : vector<9x9xf32>
    %cst_21 = arith.constant dense<0.000000e+00> : vector<9x8xf32>
    %55 = tpu.matmul %54, %42, %cst_21 {dimension_numbers = #tpu.dot_dimension_numbers<[1], [0], [0], [1], [0, 0, 1, 1], [], []>} : vector<9x9xf32>, vector<9x8xf32>, vector<9x8xf32> -> vector<9x8xf32>
    %56 = vector.extract_strided_slice %21 {offsets = [0, 16], sizes = [9, 8], strides = [1, 1]} : vector<9x32xf32> to vector<9x8xf32>
    %57 = vector.extract_strided_slice %22 {offsets = [0, 16], sizes = [9, 8], strides = [1, 1]} : vector<9x32xf32> to vector<9x8xf32>
    %58 = vector.extract_strided_slice %23 {offsets = [0, 16], sizes = [9, 8], strides = [1, 1]} : vector<9x32xf32> to vector<9x8xf32>
    %cst_22 = arith.constant dense<0.000000e+00> : vector<9x9xf32>
    %59 = tpu.matmul %56, %57, %cst_22 {dimension_numbers = #tpu.dot_dimension_numbers<[1], [1], [0], [0], [0, 0, 1, 0], [], []>} : vector<9x8xf32>, vector<9x8xf32>, vector<9x9xf32> -> vector<9x9xf32>
    %60 = arith.addf %59, %13 : vector<9x9xf32>
    %cst_23 = arith.constant dense<0xFF800000> : vector<9xf32>
    %61 = vector.multi_reduction <maximumf>, %60, %cst_23 [1] : vector<9x9xf32> to vector<9xf32>
    %62 = vector.shape_cast %61 : vector<9xf32> to vector<9x1xf32>
    %63 = vector.broadcast %62 : vector<9x1xf32> to vector<9x9xf32>
    %64 = arith.subf %60, %63 : vector<9x9xf32>
    %65 = math.exp %64 : vector<9x9xf32>
    %cst_24 = arith.constant dense<0.000000e+00> : vector<9xf32>
    %66 = vector.multi_reduction <add>, %65, %cst_24 [1] : vector<9x9xf32> to vector<9xf32>
    %67 = vector.shape_cast %66 : vector<9xf32> to vector<9x1xf32>
    %68 = tpu.reciprocal %67 {approx = true} : vector<9x1xf32> -> vector<9x1xf32>
    %69 = vector.broadcast %68 : vector<9x1xf32> to vector<9x9xf32>
    %70 = arith.mulf %65, %69 : vector<9x9xf32>
    %cst_25 = arith.constant dense<0.000000e+00> : vector<9x8xf32>
    %71 = tpu.matmul %70, %58, %cst_25 {dimension_numbers = #tpu.dot_dimension_numbers<[1], [0], [0], [1], [0, 0, 1, 1], [], []>} : vector<9x9xf32>, vector<9x8xf32>, vector<9x8xf32> -> vector<9x8xf32>
    %72 = vector.extract_strided_slice %21 {offsets = [0, 24], sizes = [9, 8], strides = [1, 1]} : vector<9x32xf32> to vector<9x8xf32>
    %73 = vector.extract_strided_slice %22 {offsets = [0, 24], sizes = [9, 8], strides = [1, 1]} : vector<9x32xf32> to vector<9x8xf32>
    %74 = vector.extract_strided_slice %23 {offsets = [0, 24], sizes = [9, 8], strides = [1, 1]} : vector<9x32xf32> to vector<9x8xf32>
    %cst_26 = arith.constant dense<0.000000e+00> : vector<9x9xf32>
    %75 = tpu.matmul %72, %73, %cst_26 {dimension_numbers = #tpu.dot_dimension_numbers<[1], [1], [0], [0], [0, 0, 1, 0], [], []>} : vector<9x8xf32>, vector<9x8xf32>, vector<9x9xf32> -> vector<9x9xf32>
    %76 = arith.addf %75, %13 : vector<9x9xf32>
    %cst_27 = arith.constant dense<0xFF800000> : vector<9xf32>
    %77 = vector.multi_reduction <maximumf>, %76, %cst_27 [1] : vector<9x9xf32> to vector<9xf32>
    %78 = vector.shape_cast %77 : vector<9xf32> to vector<9x1xf32>
    %79 = vector.broadcast %78 : vector<9x1xf32> to vector<9x9xf32>
    %80 = arith.subf %76, %79 : vector<9x9xf32>
    %81 = math.exp %80 : vector<9x9xf32>
    %cst_28 = arith.constant dense<0.000000e+00> : vector<9xf32>
    %82 = vector.multi_reduction <add>, %81, %cst_28 [1] : vector<9x9xf32> to vector<9xf32>
    %83 = vector.shape_cast %82 : vector<9xf32> to vector<9x1xf32>
    %84 = tpu.reciprocal %83 {approx = true} : vector<9x1xf32> -> vector<9x1xf32>
    %85 = vector.broadcast %84 : vector<9x1xf32> to vector<9x9xf32>
    %86 = arith.mulf %81, %85 : vector<9x9xf32>
    %cst_29 = arith.constant dense<0.000000e+00> : vector<9x8xf32>
    %87 = tpu.matmul %86, %74, %cst_29 {dimension_numbers = #tpu.dot_dimension_numbers<[1], [0], [0], [1], [0, 0, 1, 1], [], []>} : vector<9x9xf32>, vector<9x8xf32>, vector<9x8xf32> -> vector<9x8xf32>
    %88 = tpu.concatenate %39, %55, %71, %87 in 1 : vector<9x8xf32>, vector<9x8xf32>, vector<9x8xf32>, vector<9x8xf32> -> vector<9x32xf32>
    %cst_30 = arith.constant dense<0.000000e+00> : vector<9x32xf32>
    %89 = tpu.matmul %88, %2, %cst_30 {dimension_numbers = #tpu.dot_dimension_numbers<[1], [0], [0], [1], [0, 0, 1, 1], [], []>} : vector<9x32xf32>, vector<32x32xf32>, vector<9x32xf32> -> vector<9x32xf32>
    %90 = vector.broadcast %3 : vector<1x32xf32> to vector<9x32xf32>
    %91 = arith.addf %89, %90 : vector<9x32xf32>
    %c0_31 = arith.constant 0 : index
    %c0_32 = arith.constant 0 : index
    %c0_33 = arith.constant 0 : index
    %92 = vector.load %arg6[%c0_31, %c0_32, %c0_33] : memref<2x9x32xf32, #tpu.memory_space<vmem>>, vector<1x9x32xf32>
    %93 = vector.shape_cast %92 : vector<1x9x32xf32> to vector<9x32xf32>
    %94 = vector.shape_cast %91 : vector<9x32xf32> to vector<1x9x32xf32>
    tpu.vector_store %arg6[%c0_31, %c0_32, %c0_33], %94 {strides = array<i32>} : memref<2x9x32xf32, #tpu.memory_space<vmem>>, vector<1x9x32xf32>,
    %c1 = arith.constant 1 : index
    %c0_34 = arith.constant 0 : index
    %c0_35 = arith.constant 0 : index
    %95 = vector.load %arg1[%c1, %c0_34, %c0_35] : memref<2x9x32xf32, #tpu.memory_space<vmem>>, vector<1x9x32xf32>
    %96 = vector.shape_cast %95 : vector<1x9x32xf32> to vector<9x32xf32>
    %cst_36 = arith.constant dense<0.000000e+00> : vector<9x96xf32>
    %97 = tpu.matmul %96, %0, %cst_36 {dimension_numbers = #tpu.dot_dimension_numbers<[1], [0], [0], [1], [0, 0, 1, 1], [], []>} : vector<9x32xf32>, vector<32x96xf32>, vector<9x96xf32> -> vector<9x96xf32>
    %98 = vector.broadcast %1 : vector<1x96xf32> to vector<9x96xf32>
    %99 = arith.addf %97, %98 : vector<9x96xf32>
    %100 = vector.extract_strided_slice %99 {offsets = [0, 0], sizes = [9, 32], strides = [1, 1]} : vector<9x96xf32> to vector<9x32xf32>
    %cst_37 = arith.constant 0.353553385 : f32
    %101 = vector.broadcast %cst_37 : f32 to vector<9x32xf32>
    %102 = arith.mulf %100, %101 : vector<9x32xf32>
    %103 = vector.extract_strided_slice %99 {offsets = [0, 32], sizes = [9, 32], strides = [1, 1]} : vector<9x96xf32> to vector<9x32xf32>
    %104 = vector.extract_strided_slice %99 {offsets = [0, 64], sizes = [9, 32], strides = [1, 1]} : vector<9x96xf32> to vector<9x32xf32>
    %105 = vector.extract_strided_slice %102 {offsets = [0, 0], sizes = [9, 8], strides = [1, 1]} : vector<9x32xf32> to vector<9x8xf32>
    %106 = vector.extract_strided_slice %103 {offsets = [0, 0], sizes = [9, 8], strides = [1, 1]} : vector<9x32xf32> to vector<9x8xf32>
    %107 = vector.extract_strided_slice %104 {offsets = [0, 0], sizes = [9, 8], strides = [1, 1]} : vector<9x32xf32> to vector<9x8xf32>
    %cst_38 = arith.constant dense<0.000000e+00> : vector<9x9xf32>
    %108 = tpu.matmul %105, %106, %cst_38 {dimension_numbers = #tpu.dot_dimension_numbers<[1], [1], [0], [0], [0, 0, 1, 0], [], []>} : vector<9x8xf32>, vector<9x8xf32>, vector<9x9xf32> -> vector<9x9xf32>
    %109 = arith.addf %108, %13 : vector<9x9xf32>
    %cst_39 = arith.constant dense<0xFF800000> : vector<9xf32>
    %110 = vector.multi_reduction <maximumf>, %109, %cst_39 [1] : vector<9x9xf32> to vector<9xf32>
    %111 = vector.shape_cast %110 : vector<9xf32> to vector<9x1xf32>
    %112 = vector.broadcast %111 : vector<9x1xf32> to vector<9x9xf32>
    %113 = arith.subf %109, %112 : vector<9x9xf32>
    %114 = math.exp %113 : vector<9x9xf32>
    %cst_40 = arith.constant dense<0.000000e+00> : vector<9xf32>
    %115 = vector.multi_reduction <add>, %114, %cst_40 [1] : vector<9x9xf32> to vector<9xf32>
    %116 = vector.shape_cast %115 : vector<9xf32> to vector<9x1xf32>
    %117 = tpu.reciprocal %116 {approx = true} : vector<9x1xf32> -> vector<9x1xf32>
    %118 = vector.broadcast %117 : vector<9x1xf32> to vector<9x9xf32>
    %119 = arith.mulf %114, %118 : vector<9x9xf32>
    %cst_41 = arith.constant dense<0.000000e+00> : vector<9x8xf32>
    %120 = tpu.matmul %119, %107, %cst_41 {dimension_numbers = #tpu.dot_dimension_numbers<[1], [0], [0], [1], [0, 0, 1, 1], [], []>} : vector<9x9xf32>, vector<9x8xf32>, vector<9x8xf32> -> vector<9x8xf32>
    %121 = vector.extract_strided_slice %102 {offsets = [0, 8], sizes = [9, 8], strides = [1, 1]} : vector<9x32xf32> to vector<9x8xf32>
    %122 = vector.extract_strided_slice %103 {offsets = [0, 8], sizes = [9, 8], strides = [1, 1]} : vector<9x32xf32> to vector<9x8xf32>
    %123 = vector.extract_strided_slice %104 {offsets = [0, 8], sizes = [9, 8], strides = [1, 1]} : vector<9x32xf32> to vector<9x8xf32>
    %cst_42 = arith.constant dense<0.000000e+00> : vector<9x9xf32>
    %124 = tpu.matmul %121, %122, %cst_42 {dimension_numbers = #tpu.dot_dimension_numbers<[1], [1], [0], [0], [0, 0, 1, 0], [], []>} : vector<9x8xf32>, vector<9x8xf32>, vector<9x9xf32> -> vector<9x9xf32>
    %125 = arith.addf %124, %13 : vector<9x9xf32>
    %cst_43 = arith.constant dense<0xFF800000> : vector<9xf32>
    %126 = vector.multi_reduction <maximumf>, %125, %cst_43 [1] : vector<9x9xf32> to vector<9xf32>
    %127 = vector.shape_cast %126 : vector<9xf32> to vector<9x1xf32>
    %128 = vector.broadcast %127 : vector<9x1xf32> to vector<9x9xf32>
    %129 = arith.subf %125, %128 : vector<9x9xf32>
    %130 = math.exp %129 : vector<9x9xf32>
    %cst_44 = arith.constant dense<0.000000e+00> : vector<9xf32>
    %131 = vector.multi_reduction <add>, %130, %cst_44 [1] : vector<9x9xf32> to vector<9xf32>
    %132 = vector.shape_cast %131 : vector<9xf32> to vector<9x1xf32>
    %133 = tpu.reciprocal %132 {approx = true} : vector<9x1xf32> -> vector<9x1xf32>
    %134 = vector.broadcast %133 : vector<9x1xf32> to vector<9x9xf32>
    %135 = arith.mulf %130, %134 : vector<9x9xf32>
    %cst_45 = arith.constant dense<0.000000e+00> : vector<9x8xf32>
    %136 = tpu.matmul %135, %123, %cst_45 {dimension_numbers = #tpu.dot_dimension_numbers<[1], [0], [0], [1], [0, 0, 1, 1], [], []>} : vector<9x9xf32>, vector<9x8xf32>, vector<9x8xf32> -> vector<9x8xf32>
    %137 = vector.extract_strided_slice %102 {offsets = [0, 16], sizes = [9, 8], strides = [1, 1]} : vector<9x32xf32> to vector<9x8xf32>
    %138 = vector.extract_strided_slice %103 {offsets = [0, 16], sizes = [9, 8], strides = [1, 1]} : vector<9x32xf32> to vector<9x8xf32>
    %139 = vector.extract_strided_slice %104 {offsets = [0, 16], sizes = [9, 8], strides = [1, 1]} : vector<9x32xf32> to vector<9x8xf32>
    %cst_46 = arith.constant dense<0.000000e+00> : vector<9x9xf32>
    %140 = tpu.matmul %137, %138, %cst_46 {dimension_numbers = #tpu.dot_dimension_numbers<[1], [1], [0], [0], [0, 0, 1, 0], [], []>} : vector<9x8xf32>, vector<9x8xf32>, vector<9x9xf32> -> vector<9x9xf32>
    %141 = arith.addf %140, %13 : vector<9x9xf32>
    %cst_47 = arith.constant dense<0xFF800000> : vector<9xf32>
    %142 = vector.multi_reduction <maximumf>, %141, %cst_47 [1] : vector<9x9xf32> to vector<9xf32>
    %143 = vector.shape_cast %142 : vector<9xf32> to vector<9x1xf32>
    %144 = vector.broadcast %143 : vector<9x1xf32> to vector<9x9xf32>
    %145 = arith.subf %141, %144 : vector<9x9xf32>
    %146 = math.exp %145 : vector<9x9xf32>
    %cst_48 = arith.constant dense<0.000000e+00> : vector<9xf32>
    %147 = vector.multi_reduction <add>, %146, %cst_48 [1] : vector<9x9xf32> to vector<9xf32>
    %148 = vector.shape_cast %147 : vector<9xf32> to vector<9x1xf32>
    %149 = tpu.reciprocal %148 {approx = true} : vector<9x1xf32> -> vector<9x1xf32>
    %150 = vector.broadcast %149 : vector<9x1xf32> to vector<9x9xf32>
    %151 = arith.mulf %146, %150 : vector<9x9xf32>
    %cst_49 = arith.constant dense<0.000000e+00> : vector<9x8xf32>
    %152 = tpu.matmul %151, %139, %cst_49 {dimension_numbers = #tpu.dot_dimension_numbers<[1], [0], [0], [1], [0, 0, 1, 1], [], []>} : vector<9x9xf32>, vector<9x8xf32>, vector<9x8xf32> -> vector<9x8xf32>
    %153 = vector.extract_strided_slice %102 {offsets = [0, 24], sizes = [9, 8], strides = [1, 1]} : vector<9x32xf32> to vector<9x8xf32>
    %154 = vector.extract_strided_slice %103 {offsets = [0, 24], sizes = [9, 8], strides = [1, 1]} : vector<9x32xf32> to vector<9x8xf32>
    %155 = vector.extract_strided_slice %104 {offsets = [0, 24], sizes = [9, 8], strides = [1, 1]} : vector<9x32xf32> to vector<9x8xf32>
    %cst_50 = arith.constant dense<0.000000e+00> : vector<9x9xf32>
    %156 = tpu.matmul %153, %154, %cst_50 {dimension_numbers = #tpu.dot_dimension_numbers<[1], [1], [0], [0], [0, 0, 1, 0], [], []>} : vector<9x8xf32>, vector<9x8xf32>, vector<9x9xf32> -> vector<9x9xf32>
    %157 = arith.addf %156, %13 : vector<9x9xf32>
    %cst_51 = arith.constant dense<0xFF800000> : vector<9xf32>
    %158 = vector.multi_reduction <maximumf>, %157, %cst_51 [1] : vector<9x9xf32> to vector<9xf32>
    %159 = vector.shape_cast %158 : vector<9xf32> to vector<9x1xf32>
    %160 = vector.broadcast %159 : vector<9x1xf32> to vector<9x9xf32>
    %161 = arith.subf %157, %160 : vector<9x9xf32>
    %162 = math.exp %161 : vector<9x9xf32>
    %cst_52 = arith.constant dense<0.000000e+00> : vector<9xf32>
    %163 = vector.multi_reduction <add>, %162, %cst_52 [1] : vector<9x9xf32> to vector<9xf32>
    %164 = vector.shape_cast %163 : vector<9xf32> to vector<9x1xf32>
    %165 = tpu.reciprocal %164 {approx = true} : vector<9x1xf32> -> vector<9x1xf32>
    %166 = vector.broadcast %165 : vector<9x1xf32> to vector<9x9xf32>
    %167 = arith.mulf %162, %166 : vector<9x9xf32>
    %cst_53 = arith.constant dense<0.000000e+00> : vector<9x8xf32>
    %168 = tpu.matmul %167, %155, %cst_53 {dimension_numbers = #tpu.dot_dimension_numbers<[1], [0], [0], [1], [0, 0, 1, 1], [], []>} : vector<9x9xf32>, vector<9x8xf32>, vector<9x8xf32> -> vector<9x8xf32>
    %169 = tpu.concatenate %120, %136, %152, %168 in 1 : vector<9x8xf32>, vector<9x8xf32>, vector<9x8xf32>, vector<9x8xf32> -> vector<9x32xf32>
    %cst_54 = arith.constant dense<0.000000e+00> : vector<9x32xf32>
    %170 = tpu.matmul %169, %2, %cst_54 {dimension_numbers = #tpu.dot_dimension_numbers<[1], [0], [0], [1], [0, 0, 1, 1], [], []>} : vector<9x32xf32>, vector<32x32xf32>, vector<9x32xf32> -> vector<9x32xf32>
    %171 = vector.broadcast %3 : vector<1x32xf32> to vector<9x32xf32>
    %172 = arith.addf %170, %171 : vector<9x32xf32>
    %c1_55 = arith.constant 1 : index
    %c0_56 = arith.constant 0 : index
    %c0_57 = arith.constant 0 : index
    %173 = vector.load %arg6[%c1_55, %c0_56, %c0_57] : memref<2x9x32xf32, #tpu.memory_space<vmem>>, vector<1x9x32xf32>
    %174 = vector.shape_cast %173 : vector<1x9x32xf32> to vector<9x32xf32>
    %175 = vector.shape_cast %172 : vector<9x32xf32> to vector<1x9x32xf32>
    tpu.vector_store %arg6[%c1_55, %c0_56, %c0_57], %175 {strides = array<i32>} : memref<2x9x32xf32, #tpu.memory_space<vmem>>, vector<1x9x32xf32>,
    return
  }
  func.func @transform_0(%arg0: i32) -> (i32, i32, i32) {
    %c0_i32 = arith.constant 0 : i32
    %c0_i32_0 = arith.constant 0 : i32
    %c0_i32_1 = arith.constant 0 : i32
    return %arg0, %c0_i32, %c0_i32_0 : i32, i32, i32
  }
  func.func @transform_1(%arg0: i32) -> (i32, i32) {
    %c0_i32 = arith.constant 0 : i32
    %c0_i32_0 = arith.constant 0 : i32
    %c0_i32_1 = arith.constant 0 : i32
    return %c0_i32, %c0_i32_0 : i32, i32
  }
  func.func @transform_2(%arg0: i32) -> (i32, i32) {
    %c0_i32 = arith.constant 0 : i32
    %c0_i32_0 = arith.constant 0 : i32
    %c0_i32_1 = arith.constant 0 : i32
    return %c0_i32, %c0_i32_0 : i32, i32
  }
  func.func @transform_3(%arg0: i32) -> (i32, i32) {
    %c0_i32 = arith.constant 0 : i32
    %c0_i32_0 = arith.constant 0 : i32
    %c0_i32_1 = arith.constant 0 : i32
    return %c0_i32, %c0_i32_0 : i32, i32
  }
  func.func @transform_4(%arg0: i32) -> (i32, i32) {
    %c0_i32 = arith.constant 0 : i32
    %c0_i32_0 = arith.constant 0 : i32
    %c0_i32_1 = arith.constant 0 : i32
    return %c0_i32, %c0_i32_0 : i32, i32
  }
  func.func @transform_5(%arg0: i32) -> (i32, i32, i32) {
    %c0_i32 = arith.constant 0 : i32
    %c0_i32_0 = arith.constant 0 : i32
    %c0_i32_1 = arith.constant 0 : i32
    return %arg0, %c0_i32, %c0_i32_0 : i32, i32, i32
  }
}

</mosaic_0001>

<llo_original>
// kernel: tpu_custom_call.1
$region0: #{tpu_custom_call.1}
  #allocation0 [shape = 'u32[]', space=smem, size = 0x4, offset = 0x4, fixed_abs, tag = 'smem constant byte address 0x4 - core index']
  #allocation1 [shape = 'u32[144,128]{1,0:T(1,128)}', space=vmem, size = 0x12000, scoped, tag = 'internal scratch']
  %s0 = inlined_call_operand.vmem [shape: f32[2,9,32], index: 0, kind: input, shape index: {}]
  %s1 = inlined_call_operand.vmem [shape: f32[32,96], index: 1, kind: input, shape index: {}]
  %s2 = inlined_call_operand.vmem [shape: f32[1,96], index: 2, kind: input, shape index: {}]
  %s3 = inlined_call_operand.hbm [shape: f32[32,32], index: 3, kind: input, shape index: {}]
  %s4 = inlined_call_operand.vmem [shape: f32[1,32], index: 4, kind: input, shape index: {}]
  %s5 = inlined_call_operand.vmem [shape: f32[2,9,32], index: 5, kind: output, shape index: {}]
  %s6 = sld [smem:[#allocation0]]
  $region34: #{tpu_custom_call.1} parent=0
    _
  %s8 = ssub.s32 1, %s6
  %s9 = scalar_select 0, %s8, %s6
  $region1: #{tpu_custom_call.1} parent=0
    #allocation2 [shape = 'u8[16384]{0}', space=vmem, size = 0x4000, scoped, tag = 'input window, operand 3, single buffered']
    #allocation3 [shape = 's32[1]{0}', space=sflag, size = 0x4, scoped, tag = 'scoped memory for tpu_custom_call.1']
    %10 = vsyncpa [#allocation3], 0
    // Predicated region
    $region2: #{tpu_custom_call.1} parent=1 // pred_check
      _
    $region3: #{tpu_custom_call.1} parent=1 // pred_check_branch
      %12 = sbr.rel (0) target = $region5
    $region4: #{tpu_custom_call.1} parent=1 // pred_region
      _
    $region5: #{tpu_custom_call.1} parent=1 // pred_fallthru
      _
    // Predicated region
    $region6: #{tpu_custom_call.1} parent=1 // pred_check
      _
    $region7: #{tpu_custom_call.1} parent=1 // pred_check_branch
      %14 = sbr.rel (0) target = $region9
    $region8: #{tpu_custom_call.1} parent=1 // pred_region
      _
    $region9: #{tpu_custom_call.1} parent=1 // pred_fallthru
      _
    // Predicated region
    $region10: #{tpu_custom_call.1} parent=1 // pred_check
      _
    $region11: #{tpu_custom_call.1} parent=1 // pred_check_branch
      %16 = sbr.rel (0) target = $region13
    $region12: #{tpu_custom_call.1} parent=1 // pred_region
      _
    $region13: #{tpu_custom_call.1} parent=1 // pred_fallthru
      _
    // Predicated region
    $region14: #{tpu_custom_call.1} parent=1 // pred_check
      _
    $region15: #{tpu_custom_call.1} parent=1 // pred_check_branch
      %18 = sbr.rel (0) target = $region17
    $region16: #{tpu_custom_call.1} parent=1 // pred_region
      %s20 = ssub.s32 512, 512
      %21 = vsyncadd [#allocation3], %s20
      %s22 = sshll.u32 [#allocation2], 4
      %s23 = int_to_ptr.vmem [resolvable:$true] %s22
      %28 = dma.hbm_to_vmem [thread:$0]  %s3, 512, %s23, [#allocation3], 128, 128, 8
    $region17: #{tpu_custom_call.1} parent=1 // pred_fallthru
      _
    // Predicated region
    $region18: #{tpu_custom_call.1} parent=1 // pred_check
      _
    $region19: #{tpu_custom_call.1} parent=1 // pred_check_branch
      %30 = sbr.rel (0) target = $region21
    $region20: #{tpu_custom_call.1} parent=1 // pred_region
      _
    $region21: #{tpu_custom_call.1} parent=1 // pred_fallthru
      _
    // Predicated region
    $region22: #{tpu_custom_call.1} parent=1 // pred_check
      _
    $region23: #{tpu_custom_call.1} parent=1 // pred_check_branch
      %32 = sbr.rel (0) target = $region25
    $region24: #{tpu_custom_call.1} parent=1 // pred_region
      %33 = dma.done [#allocation3], 512
    $region25: #{tpu_custom_call.1} parent=1 // pred_fallthru
      _
    %v34 = vld [vmem:[%s1] sm:$0xff]
    %v35 = vld [vmem:[%s1 + $0x8] sm:$0xff]
    %v36 = vld [vmem:[%s1 + $0x10] sm:$0xff]
    %v37 = vld [vmem:[%s1 + $0x18] sm:$0xff]
    %v38 = vld [vmem:[%s2] sm:$0x1]
    %v39 = vld [vmem:[#allocation2] sm:$0xff]
    %v40 = vld [vmem:[#allocation2 + $0x8] sm:$0xff]
    %v41 = vld [vmem:[#allocation2 + $0x10] sm:$0xff]
    %v42 = vld [vmem:[#allocation2 + $0x18] sm:$0xff]
    %v43 = vld [vmem:[%s4] sm:$0x1]
    %v44 = vlaneseq
    %v45 = vshrl.u32 %v44, 7
    %v46 = vadd.s32 %v45, 8
    %v47 = vlaneseq
    %v48 = vand.u32 %v47, 127
    %vm49 = vcmp.gt.s32.totalorder %v45, 0
    %vm50 = vcmp.gt.s32.totalorder %v46, 0
    %vm51 = vcmp.eq.s32.totalorder %v48, 0
    %vm52 = vmand %vm49, %vm51
    %vm53 = vmand %vm50, %vm51
    %v54 = vsel %vm52, -1e+30, 0.0
    %v55 = vsel %vm53, -1e+30, 0.0
    %v56 = vld [vmem:[%s0] sm:$0xff]
    %v57 = vld [vmem:[%s0 + $0x8] sm:$0x1]
    %v59 = vlaneseq
    %v60 = vshrl.u32 %v59, 7
    %v61 = vsub.s32 0, %v60
    %v62 = vrot.slane %v38, %v61
    %vm64 = vcmask 261120
    %v66 = vsel %vm64, %v56, 0
    %v69 = vsel %vm64, %v57, 0
    %71 = vmatprep.subr.mxu0 0.0
    %72 = vmatpush1.msra.mxu0 %v34
    %73 = vmatprep.subr.mxu0 0.0
    %74 = vmatpush1.msra.mxu0 %v35
    %75 = vmatprep.subr.mxu0 0.0
    %76 = vmatpush1.msra.mxu0 %v36
    %77 = vmatprep.subr.mxu0 0.0
    %78 = vmatpush1.msra.mxu0 %v37
    %79 = vmatprep.subr.mxu0 0.0
    %80 = vmatpush1.msra.mxu0 0.0
    %81 = vmatprep.subr.mxu0 0.0
    %82 = vmatpush1.msra.mxu0 0.0
    %83 = vmatprep.subr.mxu0 0.0
    %84 = vmatpush1.msra.mxu0 0.0
    %85 = vmatprep.subr.mxu0 0.0
    %86 = vmatpush1.msra.mxu0 0.0
    %87 = vmatprep.subr.mxu0 0.0
    %88 = vmatpush1.msra.mxu0 0.0
    %89 = vmatprep.subr.mxu0 0.0
    %90 = vmatpush1.msra.mxu0 0.0
    %91 = vmatprep.subr.mxu0 0.0
    %92 = vmatpush1.msra.mxu0 0.0
    %93 = vmatprep.subr.mxu0 0.0
    %94 = vmatpush1.msra.mxu0 0.0
    %95 = vmatprep.subr.mxu0 0.0
    %96 = vmatpush1.msra.mxu0 0.0
    %97 = vmatprep.subr.mxu0 0.0
    %98 = vmatpush1.msra.mxu0 0.0
    %99 = vmatprep.subr.mxu0 0.0
    %100 = vmatpush1.msra.mxu0 0.0
    %101 = vmatprep.subr.mxu0 0.0
    %102 = vmatpush1.msra.mxu0 0.0
    %103 = vmatprep.subr.mxu0 0.0
    %104 = vmatpush1.msra.mxu0 0.0
    %105 = vmatprep.subr.mxu0 0.0
    %106 = vmatpush1.msra.mxu0 0.0
    %107 = vmatprep.subr.mxu0 0.0
    %108 = vmatpush1.msra.mxu0 0.0
    %109 = vmatprep.subr.mxu0 0.0
    %110 = vmatpush1.msra.mxu0 0.0
    %111 = vmatprep.subr.mxu0 0.0
    %112 = vmatpush1.msra.mxu0 0.0
    %113 = vmatprep.subr.mxu0 0.0
    %114 = vmatpush1.msra.mxu0 0.0
    %115 = vmatprep.subr.mxu0 0.0
    %116 = vmatpush1.msra.mxu0 0.0
    %117 = vmatprep.subr.mxu0 0.0
    %118 = vmatpush1.msra.mxu0 0.0
    %119 = vmatprep.subr.mxu0 0.0
    %120 = vmatpush1.msra.mxu0 0.0
    %121 = vmatprep.subr.mxu0 0.0
    %122 = vmatpush1.msra.mxu0 0.0
    %123 = vmatprep.subr.mxu0 0.0
    %124 = vmatpush1.msra.mxu0 0.0
    %125 = vmatprep.subr.mxu0 0.0
    %126 = vmatpush1.msra.mxu0 0.0
    %127 = vmatprep.subr.mxu0 0.0
    %128 = vmatpush1.msra.mxu0 0.0
    %129 = vmatprep.subr.mxu0 0.0
    %130 = vmatpush1.msra.mxu0 0.0
    %131 = vmatprep.subr.mxu0 0.0
    %132 = vmatpush1.msra.mxu0 0.0
    %133 = vmatprep.subr.mxu0 0.0
    %134 = vmatpush1.msra.mxu0 0.0
    %135 = vmatprep.mubr.f32.mxu0 0.0
    %136 = vmatmul.mubr.f32.gmra.mrb[0].mxu0 %v66
    %v137 = vpop.f32.mrb[0].mxu0
    %v138 = vadd.f32 %v62, %v137
    %v139 = vpop.f32.mrb[0].mxu0
    %140 = vmatprep.mubr.f32.mxu0 0.0
    %141 = vmatmul.mubr.f32.gmra.mrb[0].mxu0 %v69
    %v142 = vpop.f32.mrb[0].mxu0
    %v143 = vadd.f32 %v62, %v142
    %v144 = vpop.f32.mrb[0].mxu0
    %145 = vdwg.mxu0
    %v146 = vmul.f32 %v138, 0.35355338
    %v147 = vmul.f32 %v143, 0.35355338
    %150 = vrot.lane.b32.xlu0 %v138, 96
    %v151 = vpop.permute.xlu0 %150
    %152 = vrot.lane.b32.xlu0 %v143, 96
    %v153 = vpop.permute.xlu0 %152
    %vm154 = vcmask 64512
    %v156 = vsel %vm154, %v146, 0
    %v159 = vsel %vm154, %v147, 0
    %v161 = vsel %vm154, %v151, 0
    %v163 = vsel %vm154, %v153, 0
    %165 = vmatprep.subr.mxu0 0.0
    %166 = vmatpush1.xpose.msra.mxu0 %v161
    %167 = vmatprep.subr.mxu0 0.0
    %168 = vmatpush1.xpose.msra.mxu0 %v163
    %169 = vmatprep.subr.mxu0 0.0
    %170 = vmatpush1.xpose.msra.mxu0 0.0
    %171 = vmatprep.subr.mxu0 0.0
    %172 = vmatpush1.xpose.msra.mxu0 0.0
    %173 = vmatprep.subr.mxu0 0.0
    %174 = vmatpush1.xpose.msra.mxu0 0.0
    %175 = vmatprep.subr.mxu0 0.0
    %176 = vmatpush1.xpose.msra.mxu0 0.0
    %177 = vmatprep.subr.mxu0 0.0
    %178 = vmatpush1.xpose.msra.mxu0 0.0
    %179 = vmatprep.subr.mxu0 0.0
    %180 = vmatpush1.xpose.msra.mxu0 0.0
    %181 = vmatprep.subr.mxu0 0.0
    %182 = vmatpush1.xpose.msra.mxu0 0.0
    %183 = vmatprep.subr.mxu0 0.0
    %184 = vmatpush1.xpose.msra.mxu0 0.0
    %185 = vmatprep.subr.mxu0 0.0
    %186 = vmatpush1.xpose.msra.mxu0 0.0
    %187 = vmatprep.subr.mxu0 0.0
    %188 = vmatpush1.xpose.msra.mxu0 0.0
    %189 = vmatprep.subr.mxu0 0.0
    %190 = vmatpush1.xpose.msra.mxu0 0.0
    %191 = vmatprep.subr.mxu0 0.0
    %192 = vmatpush1.xpose.msra.mxu0 0.0
    %193 = vmatprep.subr.mxu0 0.0
    %194 = vmatpush1.xpose.msra.mxu0 0.0
    %195 = vmatprep.subr.mxu0 0.0
    %196 = vmatpush1.xpose.msra.mxu0 0.0
    %197 = vmatprep.subr.mxu0 0.0
    %198 = vmatpush1.xpose.msra.mxu0 0.0
    %199 = vmatprep.subr.mxu0 0.0
    %200 = vmatpush1.xpose.msra.mxu0 0.0
    %201 = vmatprep.subr.mxu0 0.0
    %202 = vmatpush1.xpose.msra.mxu0 0.0
    %203 = vmatprep.subr.mxu0 0.0
    %204 = vmatpush1.xpose.msra.mxu0 0.0
    %205 = vmatprep.subr.mxu0 0.0
    %206 = vmatpush1.xpose.msra.mxu0 0.0
    %207 = vmatprep.subr.mxu0 0.0
    %208 = vmatpush1.xpose.msra.mxu0 0.0
    %209 = vmatprep.subr.mxu0 0.0
    %210 = vmatpush1.xpose.msra.mxu0 0.0
    %211 = vmatprep.subr.mxu0 0.0
    %212 = vmatpush1.xpose.msra.mxu0 0.0
    %213 = vmatprep.subr.mxu0 0.0
    %214 = vmatpush1.xpose.msra.mxu0 0.0
    %215 = vmatprep.subr.mxu0 0.0
    %216 = vmatpush1.xpose.msra.mxu0 0.0
    %217 = vmatprep.subr.mxu0 0.0
    %218 = vmatpush1.xpose.msra.mxu0 0.0
    %219 = vmatprep.subr.mxu0 0.0
    %220 = vmatpush1.xpose.msra.mxu0 0.0
    %221 = vmatprep.subr.mxu0 0.0
    %222 = vmatpush1.xpose.msra.mxu0 0.0
    %223 = vmatprep.subr.mxu0 0.0
    %224 = vmatpush1.xpose.msra.mxu0 0.0
    %225 = vmatprep.subr.mxu0 0.0
    %226 = vmatpush1.xpose.msra.mxu0 0.0
    %227 = vmatprep.subr.mxu0 0.0
    %228 = vmatpush1.xpose.msra.mxu0 0.0
    %229 = vmatprep.mubr.f32.mxu0 0.0
    %230 = vmatmul.mubr.f32.gmra.mrb[0].mxu0 %v156
    %v231 = vpop.f32.mrb[0].mxu0
    %v232 = vadd.f32 %v54, %v231
    %v233 = vpop.f32.mrb[0].mxu0
    %234 = vmatprep.mubr.f32.mxu0 0.0
    %235 = vmatmul.mubr.f32.gmra.mrb[0].mxu0 %v159
    %v236 = vpop.f32.mrb[0].mxu0
    %v237 = vadd.f32 %v55, %v236
    %v238 = vpop.f32.mrb[0].mxu0
    %239 = vdwg.mxu0
    %vm240 = vcmask 72704
    %v241 = vsel %vm240, %v232, -inf
    %242 = vmax.xlane.f32.xlu0 %v241
    %v243 = vpop.xlane.xlu0 %242
    %vm244 = vcmask 65536
    %v245 = vsel %vm244, %v237, -inf
    %246 = vmax.xlane.f32.xlu0 %v245
    %v247 = vpop.xlane.xlu0 %246
    %v248 = vsub.f32 %v232, %v243
    %v249 = vsub.f32 %v237, %v247
    %v250 = vmul.f32 %v248, 1.442695
    %v251 = vpow.pop %v250
    %v252 = vmul.f32 %v249, 1.442695
    %v253 = vpow.pop %v252
    %v254 = vsel %vm240, %v251, 0.0
    %255 = vadd.xlane.f32.xlu0 %v254
    %v256 = vpop.xlane.xlu0 %255
    %v257 = vsel %vm244, %v253, 0.0
    %258 = vadd.xlane.f32.xlu0 %v257
    %v259 = vpop.xlane.xlu0 %258
    %v260 = vrcp.pop %v256
    %v261 = vrcp.pop %v259
    %v262 = vmul.f32 %v251, %v260
    %v263 = vmul.f32 %v253, %v261
    %264 = vrot.lane.b32.xlu0 %v138, 64
    %v265 = vpop.permute.xlu0 %264
    %266 = vrot.lane.b32.xlu0 %v143, 64
    %v267 = vpop.permute.xlu0 %266
    %v270 = vsel %vm240, %v262, 0
    %v273 = vsel %vm240, %v263, 0
    %vm275 = vcmask 1040384
    %v276 = vsel %vm275, %v267, 0
    %278 = vmatprep.subr.mxu0 0.0
    %279 = vmatpush1.msra.mxu0 %v265
    %280 = vmatprep.subr.mxu0 0.0
    %281 = vmatpush1.msra.mxu0 %v276
    %282 = vmatprep.subr.mxu0 0.0
    %283 = vmatpush1.msra.mxu0 0.0
    %284 = vmatprep.subr.mxu0 0.0
    %285 = vmatpush1.msra.mxu0 0.0
    %286 = vmatprep.subr.mxu0 0.0
    %287 = vmatpush1.msra.mxu0 0.0
    %288 = vmatprep.subr.mxu0 0.0
    %289 = vmatpush1.msra.mxu0 0.0
    %290 = vmatprep.subr.mxu0 0.0
    %291 = vmatpush1.msra.mxu0 0.0
    %292 = vmatprep.subr.mxu0 0.0
    %293 = vmatpush1.msra.mxu0 0.0
    %294 = vmatprep.subr.mxu0 0.0
    %295 = vmatpush1.msra.mxu0 0.0
    %296 = vmatprep.subr.mxu0 0.0
    %297 = vmatpush1.msra.mxu0 0.0
    %298 = vmatprep.subr.mxu0 0.0
    %299 = vmatpush1.msra.mxu0 0.0
    %300 = vmatprep.subr.mxu0 0.0
    %301 = vmatpush1.msra.mxu0 0.0
    %302 = vmatprep.subr.mxu0 0.0
    %303 = vmatpush1.msra.mxu0 0.0
    %304 = vmatprep.subr.mxu0 0.0
    %305 = vmatpush1.msra.mxu0 0.0
    %306 = vmatprep.subr.mxu0 0.0
    %307 = vmatpush1.msra.mxu0 0.0
    %308 = vmatprep.subr.mxu0 0.0
    %309 = vmatpush1.msra.mxu0 0.0
    %310 = vmatprep.subr.mxu0 0.0
    %311 = vmatpush1.msra.mxu0 0.0
    %312 = vmatprep.subr.mxu0 0.0
    %313 = vmatpush1.msra.mxu0 0.0
    %314 = vmatprep.subr.mxu0 0.0
    %315 = vmatpush1.msra.mxu0 0.0
    %316 = vmatprep.subr.mxu0 0.0
    %317 = vmatpush1.msra.mxu0 0.0
    %318 = vmatprep.subr.mxu0 0.0
    %319 = vmatpush1.msra.mxu0 0.0
    %320 = vmatprep.subr.mxu0 0.0
    %321 = vmatpush1.msra.mxu0 0.0
    %322 = vmatprep.subr.mxu0 0.0
    %323 = vmatpush1.msra.mxu0 0.0
    %324 = vmatprep.subr.mxu0 0.0
    %325 = vmatpush1.msra.mxu0 0.0
    %326 = vmatprep.subr.mxu0 0.0
    %327 = vmatpush1.msra.mxu0 0.0
    %328 = vmatprep.subr.mxu0 0.0
    %329 = vmatpush1.msra.mxu0 0.0
    %330 = vmatprep.subr.mxu0 0.0
    %331 = vmatpush1.msra.mxu0 0.0
    %332 = vmatprep.subr.mxu0 0.0
    %333 = vmatpush1.msra.mxu0 0.0
    %334 = vmatprep.subr.mxu0 0.0
    %335 = vmatpush1.msra.mxu0 0.0
    %336 = vmatprep.subr.mxu0 0.0
    %337 = vmatpush1.msra.mxu0 0.0
    %338 = vmatprep.subr.mxu0 0.0
    %339 = vmatpush1.msra.mxu0 0.0
    %340 = vmatprep.subr.mxu0 0.0
    %341 = vmatpush1.msra.mxu0 0.0
    %342 = vmatprep.mubr.f32.mxu0 0.0
    %343 = vmatmul.mubr.f32.gmra.mrb[0].mxu0 %v270
    %v344 = vpop.f32.mrb[0].mxu0
    %v345 = vadd.f32 0.0, %v344
    %v346 = vpop.f32.mrb[0].mxu0
    %347 = vmatprep.mubr.f32.mxu0 0.0
    %348 = vmatmul.mubr.f32.gmra.mrb[0].mxu0 %v273
    %v349 = vpop.f32.mrb[0].mxu0
    %v350 = vadd.f32 0.0, %v349
    %v351 = vpop.f32.mrb[0].mxu0
    %352 = vdwg.mxu0
    %353 = vrot.lane.b32.xlu0 %v146, 120
    %v354 = vpop.permute.xlu0 %353
    %355 = vrot.lane.b32.xlu0 %v147, 120
    %v356 = vpop.permute.xlu0 %355
    %357 = vrot.lane.b32.xlu0 %v138, 88
    %v358 = vpop.permute.xlu0 %357
    %359 = vrot.lane.b32.xlu0 %v143, 88
    %v360 = vpop.permute.xlu0 %359
    %v361 = vsel %vm154, %v354, 0
    %v363 = vsel %vm154, %v356, 0
    %v365 = vsel %vm154, %v358, 0
    %v367 = vsel %vm154, %v360, 0
    %369 = vmatprep.subr.mxu0 0.0
    %370 = vmatpush1.xpose.msra.mxu0 %v365
    %371 = vmatprep.subr.mxu0 0.0
    %372 = vmatpush1.xpose.msra.mxu0 %v367
    %373 = vmatprep.subr.mxu0 0.0
    %374 = vmatpush1.xpose.msra.mxu0 0.0
    %375 = vmatprep.subr.mxu0 0.0
    %376 = vmatpush1.xpose.msra.mxu0 0.0
    %377 = vmatprep.subr.mxu0 0.0
    %378 = vmatpush1.xpose.msra.mxu0 0.0
    %379 = vmatprep.subr.mxu0 0.0
    %380 = vmatpush1.xpose.msra.mxu0 0.0
    %381 = vmatprep.subr.mxu0 0.0
    %382 = vmatpush1.xpose.msra.mxu0 0.0
    %383 = vmatprep.subr.mxu0 0.0
    %384 = vmatpush1.xpose.msra.mxu0 0.0
    %385 = vmatprep.subr.mxu0 0.0
    %386 = vmatpush1.xpose.msra.mxu0 0.0
    %387 = vmatprep.subr.mxu0 0.0
    %388 = vmatpush1.xpose.msra.mxu0 0.0
    %389 = vmatprep.subr.mxu0 0.0
    %390 = vmatpush1.xpose.msra.mxu0 0.0
    %391 = vmatprep.subr.mxu0 0.0
    %392 = vmatpush1.xpose.msra.mxu0 0.0
    %393 = vmatprep.subr.mxu0 0.0
    %394 = vmatpush1.xpose.msra.mxu0 0.0
    %395 = vmatprep.subr.mxu0 0.0
    %396 = vmatpush1.xpose.msra.mxu0 0.0
    %397 = vmatprep.subr.mxu0 0.0
    %398 = vmatpush1.xpose.msra.mxu0 0.0
    %399 = vmatprep.subr.mxu0 0.0
    %400 = vmatpush1.xpose.msra.mxu0 0.0
    %401 = vmatprep.subr.mxu0 0.0
    %402 = vmatpush1.xpose.msra.mxu0 0.0
    %403 = vmatprep.subr.mxu0 0.0
    %404 = vmatpush1.xpose.msra.mxu0 0.0
    %405 = vmatprep.subr.mxu0 0.0
    %406 = vmatpush1.xpose.msra.mxu0 0.0
    %407 = vmatprep.subr.mxu0 0.0
    %408 = vmatpush1.xpose.msra.mxu0 0.0
    %409 = vmatprep.subr.mxu0 0.0
    %410 = vmatpush1.xpose.msra.mxu0 0.0
    %411 = vmatprep.subr.mxu0 0.0
    %412 = vmatpush1.xpose.msra.mxu0 0.0
    %413 = vmatprep.subr.mxu0 0.0
    %414 = vmatpush1.xpose.msra.mxu0 0.0
    %415 = vmatprep.subr.mxu0 0.0
    %416 = vmatpush1.xpose.msra.mxu0 0.0
    %417 = vmatprep.subr.mxu0 0.0
    %418 = vmatpush1.xpose.msra.mxu0 0.0
    %419 = vmatprep.subr.mxu0 0.0
    %420 = vmatpush1.xpose.msra.mxu0 0.0
    %421 = vmatprep.subr.mxu0 0.0
    %422 = vmatpush1.xpose.msra.mxu0 0.0
    %423 = vmatprep.subr.mxu0 0.0
    %424 = vmatpush1.xpose.msra.mxu0 0.0
    %425 = vmatprep.subr.mxu0 0.0
    %426 = vmatpush1.xpose.msra.mxu0 0.0
    %427 = vmatprep.subr.mxu0 0.0
    %428 = vmatpush1.xpose.msra.mxu0 0.0
    %429 = vmatprep.subr.mxu0 0.0
    %430 = vmatpush1.xpose.msra.mxu0 0.0
    %431 = vmatprep.subr.mxu0 0.0
    %432 = vmatpush1.xpose.msra.mxu0 0.0
    %433 = vmatprep.mubr.f32.mxu0 0.0
    %434 = vmatmul.mubr.f32.gmra.mrb[0].mxu0 %v361
    %v435 = vpop.f32.mrb[0].mxu0
    %v436 = vadd.f32 %v54, %v435
    %v437 = vpop.f32.mrb[0].mxu0
    %438 = vmatprep.mubr.f32.mxu0 0.0
    %439 = vmatmul.mubr.f32.gmra.mrb[0].mxu0 %v363
    %v440 = vpop.f32.mrb[0].mxu0
    %v441 = vadd.f32 %v55, %v440
    %v442 = vpop.f32.mrb[0].mxu0
    %443 = vdwg.mxu0
    %v444 = vsel %vm240, %v436, -inf
    %445 = vmax.xlane.f32.xlu0 %v444
    %v446 = vpop.xlane.xlu0 %445
    %v447 = vsel %vm244, %v441, -inf
    %448 = vmax.xlane.f32.xlu0 %v447
    %v449 = vpop.xlane.xlu0 %448
    %v450 = vsub.f32 %v436, %v446
    %v451 = vsub.f32 %v441, %v449
    %v452 = vmul.f32 %v450, 1.442695
    %v453 = vpow.pop %v452
    %v454 = vmul.f32 %v451, 1.442695
    %v455 = vpow.pop %v454
    %v456 = vsel %vm240, %v453, 0.0
    %457 = vadd.xlane.f32.xlu0 %v456
    %v458 = vpop.xlane.xlu0 %457
    %v459 = vsel %vm244, %v455, 0.0
    %460 = vadd.xlane.f32.xlu0 %v459
    %v461 = vpop.xlane.xlu0 %460
    %v462 = vrcp.pop %v458
    %v463 = vrcp.pop %v461
    %v464 = vmul.f32 %v453, %v462
    %v465 = vmul.f32 %v455, %v463
    %466 = vrot.lane.b32.xlu0 %v138, 56
    %v467 = vpop.permute.xlu0 %466
    %468 = vrot.lane.b32.xlu0 %v143, 56
    %v469 = vpop.permute.xlu0 %468
    %v472 = vsel %vm240, %v464, 0
    %v475 = vsel %vm240, %v465, 0
    %v477 = vsel %vm275, %v469, 0
    %479 = vmatprep.subr.mxu0 0.0
    %480 = vmatpush1.msra.mxu0 %v467
    %481 = vmatprep.subr.mxu0 0.0
    %482 = vmatpush1.msra.mxu0 %v477
    %483 = vmatprep.subr.mxu0 0.0
    %484 = vmatpush1.msra.mxu0 0.0
    %485 = vmatprep.subr.mxu0 0.0
    %486 = vmatpush1.msra.mxu0 0.0
    %487 = vmatprep.subr.mxu0 0.0
    %488 = vmatpush1.msra.mxu0 0.0
    %489 = vmatprep.subr.mxu0 0.0
    %490 = vmatpush1.msra.mxu0 0.0
    %491 = vmatprep.subr.mxu0 0.0
    %492 = vmatpush1.msra.mxu0 0.0
    %493 = vmatprep.subr.mxu0 0.0
    %494 = vmatpush1.msra.mxu0 0.0
    %495 = vmatprep.subr.mxu0 0.0
    %496 = vmatpush1.msra.mxu0 0.0
    %497 = vmatprep.subr.mxu0 0.0
    %498 = vmatpush1.msra.mxu0 0.0
    %499 = vmatprep.subr.mxu0 0.0
    %500 = vmatpush1.msra.mxu0 0.0
    %501 = vmatprep.subr.mxu0 0.0
    %502 = vmatpush1.msra.mxu0 0.0
    %503 = vmatprep.subr.mxu0 0.0
    %504 = vmatpush1.msra.mxu0 0.0
    %505 = vmatprep.subr.mxu0 0.0
    %506 = vmatpush1.msra.mxu0 0.0
    %507 = vmatprep.subr.mxu0 0.0
    %508 = vmatpush1.msra.mxu0 0.0
    %509 = vmatprep.subr.mxu0 0.0
    %510 = vmatpush1.msra.mxu0 0.0
    %511 = vmatprep.subr.mxu0 0.0
    %512 = vmatpush1.msra.mxu0 0.0
    %513 = vmatprep.subr.mxu0 0.0
    %514 = vmatpush1.msra.mxu0 0.0
    %515 = vmatprep.subr.mxu0 0.0
    %516 = vmatpush1.msra.mxu0 0.0
    %517 = vmatprep.subr.mxu0 0.0
    %518 = vmatpush1.msra.mxu0 0.0
    %519 = vmatprep.subr.mxu0 0.0
    %520 = vmatpush1.msra.mxu0 0.0
    %521 = vmatprep.subr.mxu0 0.0
    %522 = vmatpush1.msra.mxu0 0.0
    %523 = vmatprep.subr.mxu0 0.0
    %524 = vmatpush1.msra.mxu0 0.0
    %525 = vmatprep.subr.mxu0 0.0
    %526 = vmatpush1.msra.mxu0 0.0
    %527 = vmatprep.subr.mxu0 0.0
    %528 = vmatpush1.msra.mxu0 0.0
    %529 = vmatprep.subr.mxu0 0.0
    %530 = vmatpush1.msra.mxu0 0.0
    %531 = vmatprep.subr.mxu0 0.0
    %532 = vmatpush1.msra.mxu0 0.0
    %533 = vmatprep.subr.mxu0 0.0
    %534 = vmatpush1.msra.mxu0 0.0
    %535 = vmatprep.subr.mxu0 0.0
    %536 = vmatpush1.msra.mxu0 0.0
    %537 = vmatprep.subr.mxu0 0.0
    %538 = vmatpush1.msra.mxu0 0.0
    %539 = vmatprep.subr.mxu0 0.0
    %540 = vmatpush1.msra.mxu0 0.0
    %541 = vmatprep.subr.mxu0 0.0
    %542 = vmatpush1.msra.mxu0 0.0
    %543 = vmatprep.mubr.f32.mxu0 0.0
    %544 = vmatmul.mubr.f32.gmra.mrb[0].mxu0 %v472
    %v545 = vpop.f32.mrb[0].mxu0
    %v546 = vadd.f32 0.0, %v545
    %v547 = vpop.f32.mrb[0].mxu0
    %548 = vmatprep.mubr.f32.mxu0 0.0
    %549 = vmatmul.mubr.f32.gmra.mrb[0].mxu0 %v475
    %v550 = vpop.f32.mrb[0].mxu0
    %v551 = vadd.f32 0.0, %v550
    %v552 = vpop.f32.mrb[0].mxu0
    %553 = vdwg.mxu0
    %554 = vrot.lane.b32.xlu0 %v146, 112
    %v555 = vpop.permute.xlu0 %554
    %556 = vrot.lane.b32.xlu0 %v147, 112
    %v557 = vpop.permute.xlu0 %556
    %558 = vrot.lane.b32.xlu0 %v138, 80
    %v559 = vpop.permute.xlu0 %558
    %560 = vrot.lane.b32.xlu0 %v143, 80
    %v561 = vpop.permute.xlu0 %560
    %v562 = vsel %vm154, %v555, 0
    %v564 = vsel %vm154, %v557, 0
    %v566 = vsel %vm154, %v559, 0
    %v568 = vsel %vm154, %v561, 0
    %570 = vmatprep.subr.mxu0 0.0
    %571 = vmatpush1.xpose.msra.mxu0 %v566
    %572 = vmatprep.subr.mxu0 0.0
    %573 = vmatpush1.xpose.msra.mxu0 %v568
    %574 = vmatprep.subr.mxu0 0.0
    %575 = vmatpush1.xpose.msra.mxu0 0.0
    %576 = vmatprep.subr.mxu0 0.0
    %577 = vmatpush1.xpose.msra.mxu0 0.0
    %578 = vmatprep.subr.mxu0 0.0
    %579 = vmatpush1.xpose.msra.mxu0 0.0
    %580 = vmatprep.subr.mxu0 0.0
    %581 = vmatpush1.xpose.msra.mxu0 0.0
    %582 = vmatprep.subr.mxu0 0.0
    %583 = vmatpush1.xpose.msra.mxu0 0.0
    %584 = vmatprep.subr.mxu0 0.0
    %585 = vmatpush1.xpose.msra.mxu0 0.0
    %586 = vmatprep.subr.mxu0 0.0
    %587 = vmatpush1.xpose.msra.mxu0 0.0
    %588 = vmatprep.subr.mxu0 0.0
    %589 = vmatpush1.xpose.msra.mxu0 0.0
    %590 = vmatprep.subr.mxu0 0.0
    %591 = vmatpush1.xpose.msra.mxu0 0.0
    %592 = vmatprep.subr.mxu0 0.0
    %593 = vmatpush1.xpose.msra.mxu0 0.0
    %594 = vmatprep.subr.mxu0 0.0
    %595 = vmatpush1.xpose.msra.mxu0 0.0
    %596 = vmatprep.subr.mxu0 0.0
    %597 = vmatpush1.xpose.msra.mxu0 0.0
    %598 = vmatprep.subr.mxu0 0.0
    %599 = vmatpush1.xpose.msra.mxu0 0.0
    %600 = vmatprep.subr.mxu0 0.0
    %601 = vmatpush1.xpose.msra.mxu0 0.0
    %602 = vmatprep.subr.mxu0 0.0
    %603 = vmatpush1.xpose.msra.mxu0 0.0
    %604 = vmatprep.subr.mxu0 0.0
    %605 = vmatpush1.xpose.msra.mxu0 0.0
    %606 = vmatprep.subr.mxu0 0.0
    %607 = vmatpush1.xpose.msra.mxu0 0.0
    %608 = vmatprep.subr.mxu0 0.0
    %609 = vmatpush1.xpose.msra.mxu0 0.0
    %610 = vmatprep.subr.mxu0 0.0
    %611 = vmatpush1.xpose.msra.mxu0 0.0
    %612 = vmatprep.subr.mxu0 0.0
    %613 = vmatpush1.xpose.msra.mxu0 0.0
    %614 = vmatprep.subr.mxu0 0.0
    %615 = vmatpush1.xpose.msra.mxu0 0.0
    %616 = vmatprep.subr.mxu0 0.0
    %617 = vmatpush1.xpose.msra.mxu0 0.0
    %618 = vmatprep.subr.mxu0 0.0
    %619 = vmatpush1.xpose.msra.mxu0 0.0
    %620 = vmatprep.subr.mxu0 0.0
    %621 = vmatpush1.xpose.msra.mxu0 0.0
    %622 = vmatprep.subr.mxu0 0.0
    %623 = vmatpush1.xpose.msra.mxu0 0.0
    %624 = vmatprep.subr.mxu0 0.0
    %625 = vmatpush1.xpose.msra.mxu0 0.0
    %626 = vmatprep.subr.mxu0 0.0
    %627 = vmatpush1.xpose.msra.mxu0 0.0
    %628 = vmatprep.subr.mxu0 0.0
    %629 = vmatpush1.xpose.msra.mxu0 0.0
    %630 = vmatprep.subr.mxu0 0.0
    %631 = vmatpush1.xpose.msra.mxu0 0.0
    %632 = vmatprep.subr.mxu0 0.0
    %633 = vmatpush1.xpose.msra.mxu0 0.0
    %634 = vmatprep.mubr.f32.mxu0 0.0
    %635 = vmatmul.mubr.f32.gmra.mrb[0].mxu0 %v562
    %v636 = vpop.f32.mrb[0].mxu0
    %v637 = vadd.f32 %v54, %v636
    %v638 = vpop.f32.mrb[0].mxu0
    %639 = vmatprep.mubr.f32.mxu0 0.0
    %640 = vmatmul.mubr.f32.gmra.mrb[0].mxu0 %v564
    %v641 = vpop.f32.mrb[0].mxu0
    %v642 = vadd.f32 %v55, %v641
    %v643 = vpop.f32.mrb[0].mxu0
    %644 = vdwg.mxu0
    %v645 = vsel %vm240, %v637, -inf
    %646 = vmax.xlane.f32.xlu0 %v645
    %v647 = vpop.xlane.xlu0 %646
    %v648 = vsel %vm244, %v642, -inf
    %649 = vmax.xlane.f32.xlu0 %v648
    %v650 = vpop.xlane.xlu0 %649
    %v651 = vsub.f32 %v637, %v647
    %v652 = vsub.f32 %v642, %v650
    %v653 = vmul.f32 %v651, 1.442695
    %v654 = vpow.pop %v653
    %v655 = vmul.f32 %v652, 1.442695
    %v656 = vpow.pop %v655
    %v657 = vsel %vm240, %v654, 0.0
    %658 = vadd.xlane.f32.xlu0 %v657
    %v659 = vpop.xlane.xlu0 %658
    %v660 = vsel %vm244, %v656, 0.0
    %661 = vadd.xlane.f32.xlu0 %v660
    %v662 = vpop.xlane.xlu0 %661
    %v663 = vrcp.pop %v659
    %v664 = vrcp.pop %v662
    %v665 = vmul.f32 %v654, %v663
    %v666 = vmul.f32 %v656, %v664
    %667 = vrot.lane.b32.xlu0 %v138, 48
    %v668 = vpop.permute.xlu0 %667
    %669 = vrot.lane.b32.xlu0 %v143, 48
    %v670 = vpop.permute.xlu0 %669
    %v673 = vsel %vm240, %v665, 0
    %v676 = vsel %vm240, %v666, 0
    %v678 = vsel %vm275, %v670, 0
    %680 = vmatprep.subr.mxu0 0.0
    %681 = vmatpush1.msra.mxu0 %v668
    %682 = vmatprep.subr.mxu0 0.0
    %683 = vmatpush1.msra.mxu0 %v678
    %684 = vmatprep.subr.mxu0 0.0
    %685 = vmatpush1.msra.mxu0 0.0
    %686 = vmatprep.subr.mxu0 0.0
    %687 = vmatpush1.msra.mxu0 0.0
    %688 = vmatprep.subr.mxu0 0.0
    %689 = vmatpush1.msra.mxu0 0.0
    %690 = vmatprep.subr.mxu0 0.0
    %691 = vmatpush1.msra.mxu0 0.0
    %692 = vmatprep.subr.mxu0 0.0
    %693 = vmatpush1.msra.mxu0 0.0
    %694 = vmatprep.subr.mxu0 0.0
    %695 = vmatpush1.msra.mxu0 0.0
    %696 = vmatprep.subr.mxu0 0.0
    %697 = vmatpush1.msra.mxu0 0.0
    %698 = vmatprep.subr.mxu0 0.0
    %699 = vmatpush1.msra.mxu0 0.0
    %700 = vmatprep.subr.mxu0 0.0
    %701 = vmatpush1.msra.mxu0 0.0
    %702 = vmatprep.subr.mxu0 0.0
    %703 = vmatpush1.msra.mxu0 0.0
    %704 = vmatprep.subr.mxu0 0.0
    %705 = vmatpush1.msra.mxu0 0.0
    %706 = vmatprep.subr.mxu0 0.0
    %707 = vmatpush1.msra.mxu0 0.0
    %708 = vmatprep.subr.mxu0 0.0
    %709 = vmatpush1.msra.mxu0 0.0
    %710 = vmatprep.subr.mxu0 0.0
    %711 = vmatpush1.msra.mxu0 0.0
    %712 = vmatprep.subr.mxu0 0.0
    %713 = vmatpush1.msra.mxu0 0.0
    %714 = vmatprep.subr.mxu0 0.0
    %715 = vmatpush1.msra.mxu0 0.0
    %716 = vmatprep.subr.mxu0 0.0
    %717 = vmatpush1.msra.mxu0 0.0
    %718 = vmatprep.subr.mxu0 0.0
    %719 = vmatpush1.msra.mxu0 0.0
    %720 = vmatprep.subr.mxu0 0.0
    %721 = vmatpush1.msra.mxu0 0.0
    %722 = vmatprep.subr.mxu0 0.0
    %723 = vmatpush1.msra.mxu0 0.0
    %724 = vmatprep.subr.mxu0 0.0
    %725 = vmatpush1.msra.mxu0 0.0
    %726 = vmatprep.subr.mxu0 0.0
    %727 = vmatpush1.msra.mxu0 0.0
    %728 = vmatprep.subr.mxu0 0.0
    %729 = vmatpush1.msra.mxu0 0.0
    %730 = vmatprep.subr.mxu0 0.0
    %731 = vmatpush1.msra.mxu0 0.0
    %732 = vmatprep.subr.mxu0 0.0
    %733 = vmatpush1.msra.mxu0 0.0
    %734 = vmatprep.subr.mxu0 0.0
    %735 = vmatpush1.msra.mxu0 0.0
    %736 = vmatprep.subr.mxu0 0.0
    %737 = vmatpush1.msra.mxu0 0.0
    %738 = vmatprep.subr.mxu0 0.0
    %739 = vmatpush1.msra.mxu0 0.0
    %740 = vmatprep.subr.mxu0 0.0
    %741 = vmatpush1.msra.mxu0 0.0
    %742 = vmatprep.subr.mxu0 0.0
    %743 = vmatpush1.msra.mxu0 0.0
    %744 = vmatprep.mubr.f32.mxu0 0.0
    %745 = vmatmul.mubr.f32.gmra.mrb[0].mxu0 %v673
    %v746 = vpop.f32.mrb[0].mxu0
    %v747 = vadd.f32 0.0, %v746
    %v748 = vpop.f32.mrb[0].mxu0
    %749 = vmatprep.mubr.f32.mxu0 0.0
    %750 = vmatmul.mubr.f32.gmra.mrb[0].mxu0 %v676
    %v751 = vpop.f32.mrb[0].mxu0
    %v752 = vadd.f32 0.0, %v751
    %v753 = vpop.f32.mrb[0].mxu0
    %754 = vdwg.mxu0
    %755 = vrot.lane.b32.xlu0 %v146, 104
    %v756 = vpop.permute.xlu0 %755
    %757 = vrot.lane.b32.xlu0 %v147, 104
    %v758 = vpop.permute.xlu0 %757
    %759 = vrot.lane.b32.xlu0 %v138, 72
    %v760 = vpop.permute.xlu0 %759
    %761 = vrot.lane.b32.xlu0 %v143, 72
    %v762 = vpop.permute.xlu0 %761
    %v763 = vsel %vm154, %v756, 0
    %v765 = vsel %vm154, %v758, 0
    %v767 = vsel %vm154, %v760, 0
    %v769 = vsel %vm154, %v762, 0
    %771 = vmatprep.subr.mxu0 0.0
    %772 = vmatpush1.xpose.msra.mxu0 %v767
    %773 = vmatprep.subr.mxu0 0.0
    %774 = vmatpush1.xpose.msra.mxu0 %v769
    %775 = vmatprep.subr.mxu0 0.0
    %776 = vmatpush1.xpose.msra.mxu0 0.0
    %777 = vmatprep.subr.mxu0 0.0
    %778 = vmatpush1.xpose.msra.mxu0 0.0
    %779 = vmatprep.subr.mxu0 0.0
    %780 = vmatpush1.xpose.msra.mxu0 0.0
    %781 = vmatprep.subr.mxu0 0.0
    %782 = vmatpush1.xpose.msra.mxu0 0.0
    %783 = vmatprep.subr.mxu0 0.0
    %784 = vmatpush1.xpose.msra.mxu0 0.0
    %785 = vmatprep.subr.mxu0 0.0
    %786 = vmatpush1.xpose.msra.mxu0 0.0
    %787 = vmatprep.subr.mxu0 0.0
    %788 = vmatpush1.xpose.msra.mxu0 0.0
    %789 = vmatprep.subr.mxu0 0.0
    %790 = vmatpush1.xpose.msra.mxu0 0.0
    %791 = vmatprep.subr.mxu0 0.0
    %792 = vmatpush1.xpose.msra.mxu0 0.0
    %793 = vmatprep.subr.mxu0 0.0
    %794 = vmatpush1.xpose.msra.mxu0 0.0
    %795 = vmatprep.subr.mxu0 0.0
    %796 = vmatpush1.xpose.msra.mxu0 0.0
    %797 = vmatprep.subr.mxu0 0.0
    %798 = vmatpush1.xpose.msra.mxu0 0.0
    %799 = vmatprep.subr.mxu0 0.0
    %800 = vmatpush1.xpose.msra.mxu0 0.0
    %801 = vmatprep.subr.mxu0 0.0
    %802 = vmatpush1.xpose.msra.mxu0 0.0
    %803 = vmatprep.subr.mxu0 0.0
    %804 = vmatpush1.xpose.msra.mxu0 0.0
    %805 = vmatprep.subr.mxu0 0.0
    %806 = vmatpush1.xpose.msra.mxu0 0.0
    %807 = vmatprep.subr.mxu0 0.0
    %808 = vmatpush1.xpose.msra.mxu0 0.0
    %809 = vmatprep.subr.mxu0 0.0
    %810 = vmatpush1.xpose.msra.mxu0 0.0
    %811 = vmatprep.subr.mxu0 0.0
    %812 = vmatpush1.xpose.msra.mxu0 0.0
    %813 = vmatprep.subr.mxu0 0.0
    %814 = vmatpush1.xpose.msra.mxu0 0.0
    %815 = vmatprep.subr.mxu0 0.0
    %816 = vmatpush1.xpose.msra.mxu0 0.0
    %817 = vmatprep.subr.mxu0 0.0
    %818 = vmatpush1.xpose.msra.mxu0 0.0
    %819 = vmatprep.subr.mxu0 0.0
    %820 = vmatpush1.xpose.msra.mxu0 0.0
    %821 = vmatprep.subr.mxu0 0.0
    %822 = vmatpush1.xpose.msra.mxu0 0.0
    %823 = vmatprep.subr.mxu0 0.0
    %824 = vmatpush1.xpose.msra.mxu0 0.0
    %825 = vmatprep.subr.mxu0 0.0
    %826 = vmatpush1.xpose.msra.mxu0 0.0
    %827 = vmatprep.subr.mxu0 0.0
    %828 = vmatpush1.xpose.msra.mxu0 0.0
    %829 = vmatprep.subr.mxu0 0.0
    %830 = vmatpush1.xpose.msra.mxu0 0.0
    %831 = vmatprep.subr.mxu0 0.0
    %832 = vmatpush1.xpose.msra.mxu0 0.0
    %833 = vmatprep.subr.mxu0 0.0
    %834 = vmatpush1.xpose.msra.mxu0 0.0
    %835 = vmatprep.mubr.f32.mxu0 0.0
    %836 = vmatmul.mubr.f32.gmra.mrb[0].mxu0 %v763
    %v837 = vpop.f32.mrb[0].mxu0
    %v838 = vadd.f32 %v54, %v837
    %v839 = vpop.f32.mrb[0].mxu0
    %840 = vmatprep.mubr.f32.mxu0 0.0
    %841 = vmatmul.mubr.f32.gmra.mrb[0].mxu0 %v765
    %v842 = vpop.f32.mrb[0].mxu0
    %v843 = vadd.f32 %v55, %v842
    %v844 = vpop.f32.mrb[0].mxu0
    %845 = vdwg.mxu0
    %v846 = vsel %vm240, %v838, -inf
    %847 = vmax.xlane.f32.xlu0 %v846
    %v848 = vpop.xlane.xlu0 %847
    %v849 = vsel %vm244, %v843, -inf
    %850 = vmax.xlane.f32.xlu0 %v849
    %v851 = vpop.xlane.xlu0 %850
    %v852 = vsub.f32 %v838, %v848
    %v853 = vsub.f32 %v843, %v851
    %v854 = vmul.f32 %v852, 1.442695
    %v855 = vpow.pop %v854
    %v856 = vmul.f32 %v853, 1.442695
    %v857 = vpow.pop %v856
    %v858 = vsel %vm240, %v855, 0.0
    %859 = vadd.xlane.f32.xlu0 %v858
    %v860 = vpop.xlane.xlu0 %859
    %v861 = vsel %vm244, %v857, 0.0
    %862 = vadd.xlane.f32.xlu0 %v861
    %v863 = vpop.xlane.xlu0 %862
    %v864 = vrcp.pop %v860
    %v865 = vrcp.pop %v863
    %v866 = vmul.f32 %v855, %v864
    %v867 = vmul.f32 %v857, %v865
    %868 = vrot.lane.b32.xlu0 %v138, 40
    %v869 = vpop.permute.xlu0 %868
    %870 = vrot.lane.b32.xlu0 %v143, 40
    %v871 = vpop.permute.xlu0 %870
    %v874 = vsel %vm240, %v866, 0
    %v877 = vsel %vm240, %v867, 0
    %v879 = vsel %vm275, %v871, 0
    %881 = vmatprep.subr.mxu0 0.0
    %882 = vmatpush1.msra.mxu0 %v869
    %883 = vmatprep.subr.mxu0 0.0
    %884 = vmatpush1.msra.mxu0 %v879
    %885 = vmatprep.subr.mxu0 0.0
    %886 = vmatpush1.msra.mxu0 0.0
    %887 = vmatprep.subr.mxu0 0.0
    %888 = vmatpush1.msra.mxu0 0.0
    %889 = vmatprep.subr.mxu0 0.0
    %890 = vmatpush1.msra.mxu0 0.0
    %891 = vmatprep.subr.mxu0 0.0
    %892 = vmatpush1.msra.mxu0 0.0
    %893 = vmatprep.subr.mxu0 0.0
    %894 = vmatpush1.msra.mxu0 0.0
    %895 = vmatprep.subr.mxu0 0.0
    %896 = vmatpush1.msra.mxu0 0.0
    %897 = vmatprep.subr.mxu0 0.0
    %898 = vmatpush1.msra.mxu0 0.0
    %899 = vmatprep.subr.mxu0 0.0
    %900 = vmatpush1.msra.mxu0 0.0
    %901 = vmatprep.subr.mxu0 0.0
    %902 = vmatpush1.msra.mxu0 0.0
    %903 = vmatprep.subr.mxu0 0.0
    %904 = vmatpush1.msra.mxu0 0.0
    %905 = vmatprep.subr.mxu0 0.0
    %906 = vmatpush1.msra.mxu0 0.0
    %907 = vmatprep.subr.mxu0 0.0
    %908 = vmatpush1.msra.mxu0 0.0
    %909 = vmatprep.subr.mxu0 0.0
    %910 = vmatpush1.msra.mxu0 0.0
    %911 = vmatprep.subr.mxu0 0.0
    %912 = vmatpush1.msra.mxu0 0.0
    %913 = vmatprep.subr.mxu0 0.0
    %914 = vmatpush1.msra.mxu0 0.0
    %915 = vmatprep.subr.mxu0 0.0
    %916 = vmatpush1.msra.mxu0 0.0
    %917 = vmatprep.subr.mxu0 0.0
    %918 = vmatpush1.msra.mxu0 0.0
    %919 = vmatprep.subr.mxu0 0.0
    %920 = vmatpush1.msra.mxu0 0.0
    %921 = vmatprep.subr.mxu0 0.0
    %922 = vmatpush1.msra.mxu0 0.0
    %923 = vmatprep.subr.mxu0 0.0
    %924 = vmatpush1.msra.mxu0 0.0
    %925 = vmatprep.subr.mxu0 0.0
    %926 = vmatpush1.msra.mxu0 0.0
    %927 = vmatprep.subr.mxu0 0.0
    %928 = vmatpush1.msra.mxu0 0.0
    %929 = vmatprep.subr.mxu0 0.0
    %930 = vmatpush1.msra.mxu0 0.0
    %931 = vmatprep.subr.mxu0 0.0
    %932 = vmatpush1.msra.mxu0 0.0
    %933 = vmatprep.subr.mxu0 0.0
    %934 = vmatpush1.msra.mxu0 0.0
    %935 = vmatprep.subr.mxu0 0.0
    %936 = vmatpush1.msra.mxu0 0.0
    %937 = vmatprep.subr.mxu0 0.0
    %938 = vmatpush1.msra.mxu0 0.0
    %939 = vmatprep.subr.mxu0 0.0
    %940 = vmatpush1.msra.mxu0 0.0
    %941 = vmatprep.subr.mxu0 0.0
    %942 = vmatpush1.msra.mxu0 0.0
    %943 = vmatprep.subr.mxu0 0.0
    %944 = vmatpush1.msra.mxu0 0.0
    %945 = vmatprep.mubr.f32.mxu0 0.0
    %946 = vmatmul.mubr.f32.gmra.mrb[0].mxu0 %v874
    %v947 = vpop.f32.mrb[0].mxu0
    %v948 = vadd.f32 0.0, %v947
    %v949 = vpop.f32.mrb[0].mxu0
    %950 = vmatprep.mubr.f32.mxu0 0.0
    %951 = vmatmul.mubr.f32.gmra.mrb[0].mxu0 %v877
    %v952 = vpop.f32.mrb[0].mxu0
    %v953 = vadd.f32 0.0, %v952
    %v954 = vpop.f32.mrb[0].mxu0
    %955 = vdwg.mxu0
    %958 = vrot.lane.b32.xlu0 %v546, 8
    %v959 = vpop.permute.xlu0 %958
    %960 = vrot.lane.b32.xlu0 %v551, 8
    %v961 = vpop.permute.xlu0 %960
    %966 = vrot.lane.b32.xlu0 %v747, 16
    %v967 = vpop.permute.xlu0 %966
    %968 = vrot.lane.b32.xlu0 %v752, 16
    %v969 = vpop.permute.xlu0 %968
    %974 = vrot.lane.b32.xlu0 %v948, 24
    %v975 = vpop.permute.xlu0 %974
    %976 = vrot.lane.b32.xlu0 %v953, 24
    %v977 = vpop.permute.xlu0 %976
    %v980 = vsel %vm154, %v345, %v959
    %v981 = vsel %vm154, %v350, %v961
    %vm982 = vcmask 130048
    %v983 = vsel %vm982, %v980, %v967
    %v984 = vsel %vm982, %v981, %v969
    %vm985 = vcmask 195584
    %v986 = vsel %vm985, %v983, %v975
    %v987 = vsel %vm985, %v984, %v977
    %v989 = vlaneseq
    %v990 = vshrl.u32 %v989, 7
    %v991 = vsub.s32 0, %v990
    %v992 = vrot.slane %v43, %v991
    %v995 = vsel %vm64, %v986, 0
    %v998 = vsel %vm64, %v987, 0
    %1000 = vmatprep.subr.mxu0 0.0
    %1001 = vmatpush1.msra.mxu0 %v39
    %1002 = vmatprep.subr.mxu0 0.0
    %1003 = vmatpush1.msra.mxu0 %v40
    %1004 = vmatprep.subr.mxu0 0.0
    %1005 = vmatpush1.msra.mxu0 %v41
    %1006 = vmatprep.subr.mxu0 0.0
    %1007 = vmatpush1.msra.mxu0 %v42
    %1008 = vmatprep.subr.mxu0 0.0
    %1009 = vmatpush1.msra.mxu0 0.0
    %1010 = vmatprep.subr.mxu0 0.0
    %1011 = vmatpush1.msra.mxu0 0.0
    %1012 = vmatprep.subr.mxu0 0.0
    %1013 = vmatpush1.msra.mxu0 0.0
    %1014 = vmatprep.subr.mxu0 0.0
    %1015 = vmatpush1.msra.mxu0 0.0
    %1016 = vmatprep.subr.mxu0 0.0
    %1017 = vmatpush1.msra.mxu0 0.0
    %1018 = vmatprep.subr.mxu0 0.0
    %1019 = vmatpush1.msra.mxu0 0.0
    %1020 = vmatprep.subr.mxu0 0.0
    %1021 = vmatpush1.msra.mxu0 0.0
    %1022 = vmatprep.subr.mxu0 0.0
    %1023 = vmatpush1.msra.mxu0 0.0
    %1024 = vmatprep.subr.mxu0 0.0
    %1025 = vmatpush1.msra.mxu0 0.0
    %1026 = vmatprep.subr.mxu0 0.0
    %1027 = vmatpush1.msra.mxu0 0.0
    %1028 = vmatprep.subr.mxu0 0.0
    %1029 = vmatpush1.msra.mxu0 0.0
    %1030 = vmatprep.subr.mxu0 0.0
    %1031 = vmatpush1.msra.mxu0 0.0
    %1032 = vmatprep.subr.mxu0 0.0
    %1033 = vmatpush1.msra.mxu0 0.0
    %1034 = vmatprep.subr.mxu0 0.0
    %1035 = vmatpush1.msra.mxu0 0.0
    %1036 = vmatprep.subr.mxu0 0.0
    %1037 = vmatpush1.msra.mxu0 0.0
    %1038 = vmatprep.subr.mxu0 0.0
    %1039 = vmatpush1.msra.mxu0 0.0
    %1040 = vmatprep.subr.mxu0 0.0
    %1041 = vmatpush1.msra.mxu0 0.0
    %1042 = vmatprep.subr.mxu0 0.0
    %1043 = vmatpush1.msra.mxu0 0.0
    %1044 = vmatprep.subr.mxu0 0.0
    %1045 = vmatpush1.msra.mxu0 0.0
    %1046 = vmatprep.subr.mxu0 0.0
    %1047 = vmatpush1.msra.mxu0 0.0
    %1048 = vmatprep.subr.mxu0 0.0
    %1049 = vmatpush1.msra.mxu0 0.0
    %1050 = vmatprep.subr.mxu0 0.0
    %1051 = vmatpush1.msra.mxu0 0.0
    %1052 = vmatprep.subr.mxu0 0.0
    %1053 = vmatpush1.msra.mxu0 0.0
    %1054 = vmatprep.subr.mxu0 0.0
    %1055 = vmatpush1.msra.mxu0 0.0
    %1056 = vmatprep.subr.mxu0 0.0
    %1057 = vmatpush1.msra.mxu0 0.0
    %1058 = vmatprep.subr.mxu0 0.0
    %1059 = vmatpush1.msra.mxu0 0.0
    %1060 = vmatprep.subr.mxu0 0.0
    %1061 = vmatpush1.msra.mxu0 0.0
    %1062 = vmatprep.subr.mxu0 0.0
    %1063 = vmatpush1.msra.mxu0 0.0
    %1064 = vmatprep.mubr.f32.mxu0 0.0
    %1065 = vmatmul.mubr.f32.gmra.mrb[0].mxu0 %v995
    %v1066 = vpop.f32.mrb[0].mxu0
    %v1067 = vadd.f32 %v992, %v1066
    %v1068 = vpop.f32.mrb[0].mxu0
    %1069 = vmatprep.mubr.f32.mxu0 0.0
    %1070 = vmatmul.mubr.f32.gmra.mrb[0].mxu0 %v998
    %v1071 = vpop.f32.mrb[0].mxu0
    %v1072 = vadd.f32 %v992, %v1071
    %v1073 = vpop.f32.mrb[0].mxu0
    %1074 = vdwg.mxu0
    %1075 = vst.msk [vmem:[%s5] sm:$0xff] %vm64, %v1067
    %vm1076 = vcmask 253952
    %1077 = vst.msk [vmem:[%s5 + $0x8] sm:$0x1] %vm1076, %v1072
    %s1078 = scalar_lea.vmem %s0, 16
    %v1079 = vld [vmem:[%s1078] sm:$0xff]
    %v1080 = vld [vmem:[%s1078 + $0x8] sm:$0x1]
    %v1082 = vsel %vm64, %v1079, 0
    %v1085 = vsel %vm64, %v1080, 0
    %1087 = vmatprep.subr.mxu0 0.0
    %1088 = vmatpush1.msra.mxu0 %v34
    %1089 = vmatprep.subr.mxu0 0.0
    %1090 = vmatpush1.msra.mxu0 %v35
    %1091 = vmatprep.subr.mxu0 0.0
    %1092 = vmatpush1.msra.mxu0 %v36
    %1093 = vmatprep.subr.mxu0 0.0
    %1094 = vmatpush1.msra.mxu0 %v37
    %1095 = vmatprep.subr.mxu0 0.0
    %1096 = vmatpush1.msra.mxu0 0.0
    %1097 = vmatprep.subr.mxu0 0.0
    %1098 = vmatpush1.msra.mxu0 0.0
    %1099 = vmatprep.subr.mxu0 0.0
    %1100 = vmatpush1.msra.mxu0 0.0
    %1101 = vmatprep.subr.mxu0 0.0
    %1102 = vmatpush1.msra.mxu0 0.0
    %1103 = vmatprep.subr.mxu0 0.0
    %1104 = vmatpush1.msra.mxu0 0.0
    %1105 = vmatprep.subr.mxu0 0.0
    %1106 = vmatpush1.msra.mxu0 0.0
    %1107 = vmatprep.subr.mxu0 0.0
    %1108 = vmatpush1.msra.mxu0 0.0
    %1109 = vmatprep.subr.mxu0 0.0
    %1110 = vmatpush1.msra.mxu0 0.0
    %1111 = vmatprep.subr.mxu0 0.0
    %1112 = vmatpush1.msra.mxu0 0.0
    %1113 = vmatprep.subr.mxu0 0.0
    %1114 = vmatpush1.msra.mxu0 0.0
    %1115 = vmatprep.subr.mxu0 0.0
    %1116 = vmatpush1.msra.mxu0 0.0
    %1117 = vmatprep.subr.mxu0 0.0
    %1118 = vmatpush1.msra.mxu0 0.0
    %1119 = vmatprep.subr.mxu0 0.0
    %1120 = vmatpush1.msra.mxu0 0.0
    %1121 = vmatprep.subr.mxu0 0.0
    %1122 = vmatpush1.msra.mxu0 0.0
    %1123 = vmatprep.subr.mxu0 0.0
    %1124 = vmatpush1.msra.mxu0 0.0
    %1125 = vmatprep.subr.mxu0 0.0
    %1126 = vmatpush1.msra.mxu0 0.0
    %1127 = vmatprep.subr.mxu0 0.0
    %1128 = vmatpush1.msra.mxu0 0.0
    %1129 = vmatprep.subr.mxu0 0.0
    %1130 = vmatpush1.msra.mxu0 0.0
    %1131 = vmatprep.subr.mxu0 0.0
    %1132 = vmatpush1.msra.mxu0 0.0
    %1133 = vmatprep.subr.mxu0 0.0
    %1134 = vmatpush1.msra.mxu0 0.0
    %1135 = vmatprep.subr.mxu0 0.0
    %1136 = vmatpush1.msra.mxu0 0.0
    %1137 = vmatprep.subr.mxu0 0.0
    %1138 = vmatpush1.msra.mxu0 0.0
    %1139 = vmatprep.subr.mxu0 0.0
    %1140 = vmatpush1.msra.mxu0 0.0
    %1141 = vmatprep.subr.mxu0 0.0
    %1142 = vmatpush1.msra.mxu0 0.0
    %1143 = vmatprep.subr.mxu0 0.0
    %1144 = vmatpush1.msra.mxu0 0.0
    %1145 = vmatprep.subr.mxu0 0.0
    %1146 = vmatpush1.msra.mxu0 0.0
    %1147 = vmatprep.subr.mxu0 0.0
    %1148 = vmatpush1.msra.mxu0 0.0
    %1149 = vmatprep.subr.mxu0 0.0
    %1150 = vmatpush1.msra.mxu0 0.0
    %1151 = vmatprep.mubr.f32.mxu0 0.0
    %1152 = vmatmul.mubr.f32.gmra.mrb[0].mxu0 %v1082
    %v1153 = vpop.f32.mrb[0].mxu0
    %v1154 = vadd.f32 %v62, %v1153
    %v1155 = vpop.f32.mrb[0].mxu0
    %1156 = vmatprep.mubr.f32.mxu0 0.0
    %1157 = vmatmul.mubr.f32.gmra.mrb[0].mxu0 %v1085
    %v1158 = vpop.f32.mrb[0].mxu0
    %v1159 = vadd.f32 %v62, %v1158
    %v1160 = vpop.f32.mrb[0].mxu0
    %1161 = vdwg.mxu0
    %v1162 = vmul.f32 %v1154, 0.35355338
    %v1163 = vmul.f32 %v1159, 0.35355338
    %1166 = vrot.lane.b32.xlu0 %v1154, 96
    %v1167 = vpop.permute.xlu0 %1166
    %1168 = vrot.lane.b32.xlu0 %v1159, 96
    %v1169 = vpop.permute.xlu0 %1168
    %v1171 = vsel %vm154, %v1162, 0
    %v1174 = vsel %vm154, %v1163, 0
    %v1176 = vsel %vm154, %v1167, 0
    %v1178 = vsel %vm154, %v1169, 0
    %1180 = vmatprep.subr.mxu0 0.0
    %1181 = vmatpush1.xpose.msra.mxu0 %v1176
    %1182 = vmatprep.subr.mxu0 0.0
    %1183 = vmatpush1.xpose.msra.mxu0 %v1178
    %1184 = vmatprep.subr.mxu0 0.0
    %1185 = vmatpush1.xpose.msra.mxu0 0.0
    %1186 = vmatprep.subr.mxu0 0.0
    %1187 = vmatpush1.xpose.msra.mxu0 0.0
    %1188 = vmatprep.subr.mxu0 0.0
    %1189 = vmatpush1.xpose.msra.mxu0 0.0
    %1190 = vmatprep.subr.mxu0 0.0
    %1191 = vmatpush1.xpose.msra.mxu0 0.0
    %1192 = vmatprep.subr.mxu0 0.0
    %1193 = vmatpush1.xpose.msra.mxu0 0.0
    %1194 = vmatprep.subr.mxu0 0.0
    %1195 = vmatpush1.xpose.msra.mxu0 0.0
    %1196 = vmatprep.subr.mxu0 0.0
    %1197 = vmatpush1.xpose.msra.mxu0 0.0
    %1198 = vmatprep.subr.mxu0 0.0
    %1199 = vmatpush1.xpose.msra.mxu0 0.0
    %1200 = vmatprep.subr.mxu0 0.0
    %1201 = vmatpush1.xpose.msra.mxu0 0.0
    %1202 = vmatprep.subr.mxu0 0.0
    %1203 = vmatpush1.xpose.msra.mxu0 0.0
    %1204 = vmatprep.subr.mxu0 0.0
    %1205 = vmatpush1.xpose.msra.mxu0 0.0
    %1206 = vmatprep.subr.mxu0 0.0
    %1207 = vmatpush1.xpose.msra.mxu0 0.0
    %1208 = vmatprep.subr.mxu0 0.0
    %1209 = vmatpush1.xpose.msra.mxu0 0.0
    %1210 = vmatprep.subr.mxu0 0.0
    %1211 = vmatpush1.xpose.msra.mxu0 0.0
    %1212 = vmatprep.subr.mxu0 0.0
    %1213 = vmatpush1.xpose.msra.mxu0 0.0
    %1214 = vmatprep.subr.mxu0 0.0
    %1215 = vmatpush1.xpose.msra.mxu0 0.0
    %1216 = vmatprep.subr.mxu0 0.0
    %1217 = vmatpush1.xpose.msra.mxu0 0.0
    %1218 = vmatprep.subr.mxu0 0.0
    %1219 = vmatpush1.xpose.msra.mxu0 0.0
    %1220 = vmatprep.subr.mxu0 0.0
    %1221 = vmatpush1.xpose.msra.mxu0 0.0
    %1222 = vmatprep.subr.mxu0 0.0
    %1223 = vmatpush1.xpose.msra.mxu0 0.0
    %1224 = vmatprep.subr.mxu0 0.0
    %1225 = vmatpush1.xpose.msra.mxu0 0.0
    %1226 = vmatprep.subr.mxu0 0.0
    %1227 = vmatpush1.xpose.msra.mxu0 0.0
    %1228 = vmatprep.subr.mxu0 0.0
    %1229 = vmatpush1.xpose.msra.mxu0 0.0
    %1230 = vmatprep.subr.mxu0 0.0
    %1231 = vmatpush1.xpose.msra.mxu0 0.0
    %1232 = vmatprep.subr.mxu0 0.0
    %1233 = vmatpush1.xpose.msra.mxu0 0.0
    %1234 = vmatprep.subr.mxu0 0.0
    %1235 = vmatpush1.xpose.msra.mxu0 0.0
    %1236 = vmatprep.subr.mxu0 0.0
    %1237 = vmatpush1.xpose.msra.mxu0 0.0
    %1238 = vmatprep.subr.mxu0 0.0
    %1239 = vmatpush1.xpose.msra.mxu0 0.0
    %1240 = vmatprep.subr.mxu0 0.0
    %1241 = vmatpush1.xpose.msra.mxu0 0.0
    %1242 = vmatprep.subr.mxu0 0.0
    %1243 = vmatpush1.xpose.msra.mxu0 0.0
    %1244 = vmatprep.mubr.f32.mxu0 0.0
    %1245 = vmatmul.mubr.f32.gmra.mrb[0].mxu0 %v1171
    %v1246 = vpop.f32.mrb[0].mxu0
    %v1247 = vadd.f32 %v54, %v1246
    %v1248 = vpop.f32.mrb[0].mxu0
    %1249 = vmatprep.mubr.f32.mxu0 0.0
    %1250 = vmatmul.mubr.f32.gmra.mrb[0].mxu0 %v1174
    %v1251 = vpop.f32.mrb[0].mxu0
    %v1252 = vadd.f32 %v55, %v1251
    %v1253 = vpop.f32.mrb[0].mxu0
    %1254 = vdwg.mxu0
    %v1255 = vsel %vm240, %v1247, -inf
    %1256 = vmax.xlane.f32.xlu0 %v1255
    %v1257 = vpop.xlane.xlu0 %1256
    %v1258 = vsel %vm244, %v1252, -inf
    %1259 = vmax.xlane.f32.xlu0 %v1258
    %v1260 = vpop.xlane.xlu0 %1259
    %v1261 = vsub.f32 %v1247, %v1257
    %v1262 = vsub.f32 %v1252, %v1260
    %v1263 = vmul.f32 %v1261, 1.442695
    %v1264 = vpow.pop %v1263
    %v1265 = vmul.f32 %v1262, 1.442695
    %v1266 = vpow.pop %v1265
    %v1267 = vsel %vm240, %v1264, 0.0
    %1268 = vadd.xlane.f32.xlu0 %v1267
    %v1269 = vpop.xlane.xlu0 %1268
    %v1270 = vsel %vm244, %v1266, 0.0
    %1271 = vadd.xlane.f32.xlu0 %v1270
    %v1272 = vpop.xlane.xlu0 %1271
    %v1273 = vrcp.pop %v1269
    %v1274 = vrcp.pop %v1272
    %v1275 = vmul.f32 %v1264, %v1273
    %v1276 = vmul.f32 %v1266, %v1274
    %1277 = vrot.lane.b32.xlu0 %v1154, 64
    %v1278 = vpop.permute.xlu0 %1277
    %1279 = vrot.lane.b32.xlu0 %v1159, 64
    %v1280 = vpop.permute.xlu0 %1279
    %v1283 = vsel %vm240, %v1275, 0
    %v1286 = vsel %vm240, %v1276, 0
    %v1288 = vsel %vm275, %v1280, 0
    %1290 = vmatprep.subr.mxu0 0.0
    %1291 = vmatpush1.msra.mxu0 %v1278
    %1292 = vmatprep.subr.mxu0 0.0
    %1293 = vmatpush1.msra.mxu0 %v1288
    %1294 = vmatprep.subr.mxu0 0.0
    %1295 = vmatpush1.msra.mxu0 0.0
    %1296 = vmatprep.subr.mxu0 0.0
    %1297 = vmatpush1.msra.mxu0 0.0
    %1298 = vmatprep.subr.mxu0 0.0
    %1299 = vmatpush1.msra.mxu0 0.0
    %1300 = vmatprep.subr.mxu0 0.0
    %1301 = vmatpush1.msra.mxu0 0.0
    %1302 = vmatprep.subr.mxu0 0.0
    %1303 = vmatpush1.msra.mxu0 0.0
    %1304 = vmatprep.subr.mxu0 0.0
    %1305 = vmatpush1.msra.mxu0 0.0
    %1306 = vmatprep.subr.mxu0 0.0
    %1307 = vmatpush1.msra.mxu0 0.0
    %1308 = vmatprep.subr.mxu0 0.0
    %1309 = vmatpush1.msra.mxu0 0.0
    %1310 = vmatprep.subr.mxu0 0.0
    %1311 = vmatpush1.msra.mxu0 0.0
    %1312 = vmatprep.subr.mxu0 0.0
    %1313 = vmatpush1.msra.mxu0 0.0
    %1314 = vmatprep.subr.mxu0 0.0
    %1315 = vmatpush1.msra.mxu0 0.0
    %1316 = vmatprep.subr.mxu0 0.0
    %1317 = vmatpush1.msra.mxu0 0.0
    %1318 = vmatprep.subr.mxu0 0.0
    %1319 = vmatpush1.msra.mxu0 0.0
    %1320 = vmatprep.subr.mxu0 0.0
    %1321 = vmatpush1.msra.mxu0 0.0
    %1322 = vmatprep.subr.mxu0 0.0
    %1323 = vmatpush1.msra.mxu0 0.0
    %1324 = vmatprep.subr.mxu0 0.0
    %1325 = vmatpush1.msra.mxu0 0.0
    %1326 = vmatprep.subr.mxu0 0.0
    %1327 = vmatpush1.msra.mxu0 0.0
    %1328 = vmatprep.subr.mxu0 0.0
    %1329 = vmatpush1.msra.mxu0 0.0
    %1330 = vmatprep.subr.mxu0 0.0
    %1331 = vmatpush1.msra.mxu0 0.0
    %1332 = vmatprep.subr.mxu0 0.0
    %1333 = vmatpush1.msra.mxu0 0.0
    %1334 = vmatprep.subr.mxu0 0.0
    %1335 = vmatpush1.msra.mxu0 0.0
    %1336 = vmatprep.subr.mxu0 0.0
    %1337 = vmatpush1.msra.mxu0 0.0
    %1338 = vmatprep.subr.mxu0 0.0
    %1339 = vmatpush1.msra.mxu0 0.0
    %1340 = vmatprep.subr.mxu0 0.0
    %1341 = vmatpush1.msra.mxu0 0.0
    %1342 = vmatprep.subr.mxu0 0.0
    %1343 = vmatpush1.msra.mxu0 0.0
    %1344 = vmatprep.subr.mxu0 0.0
    %1345 = vmatpush1.msra.mxu0 0.0
    %1346 = vmatprep.subr.mxu0 0.0
    %1347 = vmatpush1.msra.mxu0 0.0
    %1348 = vmatprep.subr.mxu0 0.0
    %1349 = vmatpush1.msra.mxu0 0.0
    %1350 = vmatprep.subr.mxu0 0.0
    %1351 = vmatpush1.msra.mxu0 0.0
    %1352 = vmatprep.subr.mxu0 0.0
    %1353 = vmatpush1.msra.mxu0 0.0
    %1354 = vmatprep.mubr.f32.mxu0 0.0
    %1355 = vmatmul.mubr.f32.gmra.mrb[0].mxu0 %v1283
    %v1356 = vpop.f32.mrb[0].mxu0
    %v1357 = vadd.f32 0.0, %v1356
    %v1358 = vpop.f32.mrb[0].mxu0
    %1359 = vmatprep.mubr.f32.mxu0 0.0
    %1360 = vmatmul.mubr.f32.gmra.mrb[0].mxu0 %v1286
    %v1361 = vpop.f32.mrb[0].mxu0
    %v1362 = vadd.f32 0.0, %v1361
    %v1363 = vpop.f32.mrb[0].mxu0
    %1364 = vdwg.mxu0
    %1365 = vrot.lane.b32.xlu0 %v1162, 120
    %v1366 = vpop.permute.xlu0 %1365
    %1367 = vrot.lane.b32.xlu0 %v1163, 120
    %v1368 = vpop.permute.xlu0 %1367
    %1369 = vrot.lane.b32.xlu0 %v1154, 88
    %v1370 = vpop.permute.xlu0 %1369
    %1371 = vrot.lane.b32.xlu0 %v1159, 88
    %v1372 = vpop.permute.xlu0 %1371
    %v1373 = vsel %vm154, %v1366, 0
    %v1375 = vsel %vm154, %v1368, 0
    %v1377 = vsel %vm154, %v1370, 0
    %v1379 = vsel %vm154, %v1372, 0
    %1381 = vmatprep.subr.mxu0 0.0
    %1382 = vmatpush1.xpose.msra.mxu0 %v1377
    %1383 = vmatprep.subr.mxu0 0.0
    %1384 = vmatpush1.xpose.msra.mxu0 %v1379
    %1385 = vmatprep.subr.mxu0 0.0
    %1386 = vmatpush1.xpose.msra.mxu0 0.0
    %1387 = vmatprep.subr.mxu0 0.0
    %1388 = vmatpush1.xpose.msra.mxu0 0.0
    %1389 = vmatprep.subr.mxu0 0.0
    %1390 = vmatpush1.xpose.msra.mxu0 0.0
    %1391 = vmatprep.subr.mxu0 0.0
    %1392 = vmatpush1.xpose.msra.mxu0 0.0
    %1393 = vmatprep.subr.mxu0 0.0
    %1394 = vmatpush1.xpose.msra.mxu0 0.0
    %1395 = vmatprep.subr.mxu0 0.0
    %1396 = vmatpush1.xpose.msra.mxu0 0.0
    %1397 = vmatprep.subr.mxu0 0.0
    %1398 = vmatpush1.xpose.msra.mxu0 0.0
    %1399 = vmatprep.subr.mxu0 0.0
    %1400 = vmatpush1.xpose.msra.mxu0 0.0
    %1401 = vmatprep.subr.mxu0 0.0
    %1402 = vmatpush1.xpose.msra.mxu0 0.0
    %1403 = vmatprep.subr.mxu0 0.0
    %1404 = vmatpush1.xpose.msra.mxu0 0.0
    %1405 = vmatprep.subr.mxu0 0.0
    %1406 = vmatpush1.xpose.msra.mxu0 0.0
    %1407 = vmatprep.subr.mxu0 0.0
    %1408 = vmatpush1.xpose.msra.mxu0 0.0
    %1409 = vmatprep.subr.mxu0 0.0
    %1410 = vmatpush1.xpose.msra.mxu0 0.0
    %1411 = vmatprep.subr.mxu0 0.0
    %1412 = vmatpush1.xpose.msra.mxu0 0.0
    %1413 = vmatprep.subr.mxu0 0.0
    %1414 = vmatpush1.xpose.msra.mxu0 0.0
    %1415 = vmatprep.subr.mxu0 0.0
    %1416 = vmatpush1.xpose.msra.mxu0 0.0
    %1417 = vmatprep.subr.mxu0 0.0
    %1418 = vmatpush1.xpose.msra.mxu0 0.0
    %1419 = vmatprep.subr.mxu0 0.0
    %1420 = vmatpush1.xpose.msra.mxu0 0.0
    %1421 = vmatprep.subr.mxu0 0.0
    %1422 = vmatpush1.xpose.msra.mxu0 0.0
    %1423 = vmatprep.subr.mxu0 0.0
    %1424 = vmatpush1.xpose.msra.mxu0 0.0
    %1425 = vmatprep.subr.mxu0 0.0
    %1426 = vmatpush1.xpose.msra.mxu0 0.0
    %1427 = vmatprep.subr.mxu0 0.0
    %1428 = vmatpush1.xpose.msra.mxu0 0.0
    %1429 = vmatprep.subr.mxu0 0.0
    %1430 = vmatpush1.xpose.msra.mxu0 0.0
    %1431 = vmatprep.subr.mxu0 0.0
    %1432 = vmatpush1.xpose.msra.mxu0 0.0
    %1433 = vmatprep.subr.mxu0 0.0
    %1434 = vmatpush1.xpose.msra.mxu0 0.0
    %1435 = vmatprep.subr.mxu0 0.0
    %1436 = vmatpush1.xpose.msra.mxu0 0.0
    %1437 = vmatprep.subr.mxu0 0.0
    %1438 = vmatpush1.xpose.msra.mxu0 0.0
    %1439 = vmatprep.subr.mxu0 0.0
    %1440 = vmatpush1.xpose.msra.mxu0 0.0
    %1441 = vmatprep.subr.mxu0 0.0
    %1442 = vmatpush1.xpose.msra.mxu0 0.0
    %1443 = vmatprep.subr.mxu0 0.0
    %1444 = vmatpush1.xpose.msra.mxu0 0.0
    %1445 = vmatprep.mubr.f32.mxu0 0.0
    %1446 = vmatmul.mubr.f32.gmra.mrb[0].mxu0 %v1373
    %v1447 = vpop.f32.mrb[0].mxu0
    %v1448 = vadd.f32 %v54, %v1447
    %v1449 = vpop.f32.mrb[0].mxu0
    %1450 = vmatprep.mubr.f32.mxu0 0.0
    %1451 = vmatmul.mubr.f32.gmra.mrb[0].mxu0 %v1375
    %v1452 = vpop.f32.mrb[0].mxu0
    %v1453 = vadd.f32 %v55, %v1452
    %v1454 = vpop.f32.mrb[0].mxu0
    %1455 = vdwg.mxu0
    %v1456 = vsel %vm240, %v1448, -inf
    %1457 = vmax.xlane.f32.xlu0 %v1456
    %v1458 = vpop.xlane.xlu0 %1457
    %v1459 = vsel %vm244, %v1453, -inf
    %1460 = vmax.xlane.f32.xlu0 %v1459
    %v1461 = vpop.xlane.xlu0 %1460
    %v1462 = vsub.f32 %v1448, %v1458
    %v1463 = vsub.f32 %v1453, %v1461
    %v1464 = vmul.f32 %v1462, 1.442695
    %v1465 = vpow.pop %v1464
    %v1466 = vmul.f32 %v1463, 1.442695
    %v1467 = vpow.pop %v1466
    %v1468 = vsel %vm240, %v1465, 0.0
    %1469 = vadd.xlane.f32.xlu0 %v1468
    %v1470 = vpop.xlane.xlu0 %1469
    %v1471 = vsel %vm244, %v1467, 0.0
    %1472 = vadd.xlane.f32.xlu0 %v1471
    %v1473 = vpop.xlane.xlu0 %1472
    %v1474 = vrcp.pop %v1470
    %v1475 = vrcp.pop %v1473
    %v1476 = vmul.f32 %v1465, %v1474
    %v1477 = vmul.f32 %v1467, %v1475
    %1478 = vrot.lane.b32.xlu0 %v1154, 56
    %v1479 = vpop.permute.xlu0 %1478
    %1480 = vrot.lane.b32.xlu0 %v1159, 56
    %v1481 = vpop.permute.xlu0 %1480
    %v1484 = vsel %vm240, %v1476, 0
    %v1487 = vsel %vm240, %v1477, 0
    %v1489 = vsel %vm275, %v1481, 0
    %1491 = vmatprep.subr.mxu0 0.0
    %1492 = vmatpush1.msra.mxu0 %v1479
    %1493 = vmatprep.subr.mxu0 0.0
    %1494 = vmatpush1.msra.mxu0 %v1489
    %1495 = vmatprep.subr.mxu0 0.0
    %1496 = vmatpush1.msra.mxu0 0.0
    %1497 = vmatprep.subr.mxu0 0.0
    %1498 = vmatpush1.msra.mxu0 0.0
    %1499 = vmatprep.subr.mxu0 0.0
    %1500 = vmatpush1.msra.mxu0 0.0
    %1501 = vmatprep.subr.mxu0 0.0
    %1502 = vmatpush1.msra.mxu0 0.0
    %1503 = vmatprep.subr.mxu0 0.0
    %1504 = vmatpush1.msra.mxu0 0.0
    %1505 = vmatprep.subr.mxu0 0.0
    %1506 = vmatpush1.msra.mxu0 0.0
    %1507 = vmatprep.subr.mxu0 0.0
    %1508 = vmatpush1.msra.mxu0 0.0
    %1509 = vmatprep.subr.mxu0 0.0
    %1510 = vmatpush1.msra.mxu0 0.0
    %1511 = vmatprep.subr.mxu0 0.0
    %1512 = vmatpush1.msra.mxu0 0.0
    %1513 = vmatprep.subr.mxu0 0.0
    %1514 = vmatpush1.msra.mxu0 0.0
    %1515 = vmatprep.subr.mxu0 0.0
    %1516 = vmatpush1.msra.mxu0 0.0
    %1517 = vmatprep.subr.mxu0 0.0
    %1518 = vmatpush1.msra.mxu0 0.0
    %1519 = vmatprep.subr.mxu0 0.0
    %1520 = vmatpush1.msra.mxu0 0.0
    %1521 = vmatprep.subr.mxu0 0.0
    %1522 = vmatpush1.msra.mxu0 0.0
    %1523 = vmatprep.subr.mxu0 0.0
    %1524 = vmatpush1.msra.mxu0 0.0
    %1525 = vmatprep.subr.mxu0 0.0
    %1526 = vmatpush1.msra.mxu0 0.0
    %1527 = vmatprep.subr.mxu0 0.0
    %1528 = vmatpush1.msra.mxu0 0.0
    %1529 = vmatprep.subr.mxu0 0.0
    %1530 = vmatpush1.msra.mxu0 0.0
    %1531 = vmatprep.subr.mxu0 0.0
    %1532 = vmatpush1.msra.mxu0 0.0
    %1533 = vmatprep.subr.mxu0 0.0
    %1534 = vmatpush1.msra.mxu0 0.0
    %1535 = vmatprep.subr.mxu0 0.0
    %1536 = vmatpush1.msra.mxu0 0.0
    %1537 = vmatprep.subr.mxu0 0.0
    %1538 = vmatpush1.msra.mxu0 0.0
    %1539 = vmatprep.subr.mxu0 0.0
    %1540 = vmatpush1.msra.mxu0 0.0
    %1541 = vmatprep.subr.mxu0 0.0
    %1542 = vmatpush1.msra.mxu0 0.0
    %1543 = vmatprep.subr.mxu0 0.0
    %1544 = vmatpush1.msra.mxu0 0.0
    %1545 = vmatprep.subr.mxu0 0.0
    %1546 = vmatpush1.msra.mxu0 0.0
    %1547 = vmatprep.subr.mxu0 0.0
    %1548 = vmatpush1.msra.mxu0 0.0
    %1549 = vmatprep.subr.mxu0 0.0
    %1550 = vmatpush1.msra.mxu0 0.0
    %1551 = vmatprep.subr.mxu0 0.0
    %1552 = vmatpush1.msra.mxu0 0.0
    %1553 = vmatprep.subr.mxu0 0.0
    %1554 = vmatpush1.msra.mxu0 0.0
    %1555 = vmatprep.mubr.f32.mxu0 0.0
    %1556 = vmatmul.mubr.f32.gmra.mrb[0].mxu0 %v1484
    %v1557 = vpop.f32.mrb[0].mxu0
    %v1558 = vadd.f32 0.0, %v1557
    %v1559 = vpop.f32.mrb[0].mxu0
    %1560 = vmatprep.mubr.f32.mxu0 0.0
    %1561 = vmatmul.mubr.f32.gmra.mrb[0].mxu0 %v1487
    %v1562 = vpop.f32.mrb[0].mxu0
    %v1563 = vadd.f32 0.0, %v1562
    %v1564 = vpop.f32.mrb[0].mxu0
    %1565 = vdwg.mxu0
    %1566 = vrot.lane.b32.xlu0 %v1162, 112
    %v1567 = vpop.permute.xlu0 %1566
    %1568 = vrot.lane.b32.xlu0 %v1163, 112
    %v1569 = vpop.permute.xlu0 %1568
    %1570 = vrot.lane.b32.xlu0 %v1154, 80
    %v1571 = vpop.permute.xlu0 %1570
    %1572 = vrot.lane.b32.xlu0 %v1159, 80
    %v1573 = vpop.permute.xlu0 %1572
    %v1574 = vsel %vm154, %v1567, 0
    %v1576 = vsel %vm154, %v1569, 0
    %v1578 = vsel %vm154, %v1571, 0
    %v1580 = vsel %vm154, %v1573, 0
    %1582 = vmatprep.subr.mxu0 0.0
    %1583 = vmatpush1.xpose.msra.mxu0 %v1578
    %1584 = vmatprep.subr.mxu0 0.0
    %1585 = vmatpush1.xpose.msra.mxu0 %v1580
    %1586 = vmatprep.subr.mxu0 0.0
    %1587 = vmatpush1.xpose.msra.mxu0 0.0
    %1588 = vmatprep.subr.mxu0 0.0
    %1589 = vmatpush1.xpose.msra.mxu0 0.0
    %1590 = vmatprep.subr.mxu0 0.0
    %1591 = vmatpush1.xpose.msra.mxu0 0.0
    %1592 = vmatprep.subr.mxu0 0.0
    %1593 = vmatpush1.xpose.msra.mxu0 0.0
    %1594 = vmatprep.subr.mxu0 0.0
    %1595 = vmatpush1.xpose.msra.mxu0 0.0
    %1596 = vmatprep.subr.mxu0 0.0
    %1597 = vmatpush1.xpose.msra.mxu0 0.0
    %1598 = vmatprep.subr.mxu0 0.0
    %1599 = vmatpush1.xpose.msra.mxu0 0.0
    %1600 = vmatprep.subr.mxu0 0.0
    %1601 = vmatpush1.xpose.msra.mxu0 0.0
    %1602 = vmatprep.subr.mxu0 0.0
    %1603 = vmatpush1.xpose.msra.mxu0 0.0
    %1604 = vmatprep.subr.mxu0 0.0
    %1605 = vmatpush1.xpose.msra.mxu0 0.0
    %1606 = vmatprep.subr.mxu0 0.0
    %1607 = vmatpush1.xpose.msra.mxu0 0.0
    %1608 = vmatprep.subr.mxu0 0.0
    %1609 = vmatpush1.xpose.msra.mxu0 0.0
    %1610 = vmatprep.subr.mxu0 0.0
    %1611 = vmatpush1.xpose.msra.mxu0 0.0
    %1612 = vmatprep.subr.mxu0 0.0
    %1613 = vmatpush1.xpose.msra.mxu0 0.0
    %1614 = vmatprep.subr.mxu0 0.0
    %1615 = vmatpush1.xpose.msra.mxu0 0.0
    %1616 = vmatprep.subr.mxu0 0.0
    %1617 = vmatpush1.xpose.msra.mxu0 0.0
    %1618 = vmatprep.subr.mxu0 0.0
    %1619 = vmatpush1.xpose.msra.mxu0 0.0
    %1620 = vmatprep.subr.mxu0 0.0
    %1621 = vmatpush1.xpose.msra.mxu0 0.0
    %1622 = vmatprep.subr.mxu0 0.0
    %1623 = vmatpush1.xpose.msra.mxu0 0.0
    %1624 = vmatprep.subr.mxu0 0.0
    %1625 = vmatpush1.xpose.msra.mxu0 0.0
    %1626 = vmatprep.subr.mxu0 0.0
    %1627 = vmatpush1.xpose.msra.mxu0 0.0
    %1628 = vmatprep.subr.mxu0 0.0
    %1629 = vmatpush1.xpose.msra.mxu0 0.0
    %1630 = vmatprep.subr.mxu0 0.0
    %1631 = vmatpush1.xpose.msra.mxu0 0.0
    %1632 = vmatprep.subr.mxu0 0.0
    %1633 = vmatpush1.xpose.msra.mxu0 0.0
    %1634 = vmatprep.subr.mxu0 0.0
    %1635 = vmatpush1.xpose.msra.mxu0 0.0
    %1636 = vmatprep.subr.mxu0 0.0
    %1637 = vmatpush1.xpose.msra.mxu0 0.0
    %1638 = vmatprep.subr.mxu0 0.0
    %1639 = vmatpush1.xpose.msra.mxu0 0.0
    %1640 = vmatprep.subr.mxu0 0.0
    %1641 = vmatpush1.xpose.msra.mxu0 0.0
    %1642 = vmatprep.subr.mxu0 0.0
    %1643 = vmatpush1.xpose.msra.mxu0 0.0
    %1644 = vmatprep.subr.mxu0 0.0
    %1645 = vmatpush1.xpose.msra.mxu0 0.0
    %1646 = vmatprep.mubr.f32.mxu0 0.0
    %1647 = vmatmul.mubr.f32.gmra.mrb[0].mxu0 %v1574
    %v1648 = vpop.f32.mrb[0].mxu0
    %v1649 = vadd.f32 %v54, %v1648
    %v1650 = vpop.f32.mrb[0].mxu0
    %1651 = vmatprep.mubr.f32.mxu0 0.0
    %1652 = vmatmul.mubr.f32.gmra.mrb[0].mxu0 %v1576
    %v1653 = vpop.f32.mrb[0].mxu0
    %v1654 = vadd.f32 %v55, %v1653
    %v1655 = vpop.f32.mrb[0].mxu0
    %1656 = vdwg.mxu0
    %v1657 = vsel %vm240, %v1649, -inf
    %1658 = vmax.xlane.f32.xlu0 %v1657
    %v1659 = vpop.xlane.xlu0 %1658
    %v1660 = vsel %vm244, %v1654, -inf
    %1661 = vmax.xlane.f32.xlu0 %v1660
    %v1662 = vpop.xlane.xlu0 %1661
    %v1663 = vsub.f32 %v1649, %v1659
    %v1664 = vsub.f32 %v1654, %v1662
    %v1665 = vmul.f32 %v1663, 1.442695
    %v1666 = vpow.pop %v1665
    %v1667 = vmul.f32 %v1664, 1.442695
    %v1668 = vpow.pop %v1667
    %v1669 = vsel %vm240, %v1666, 0.0
    %1670 = vadd.xlane.f32.xlu0 %v1669
    %v1671 = vpop.xlane.xlu0 %1670
    %v1672 = vsel %vm244, %v1668, 0.0
    %1673 = vadd.xlane.f32.xlu0 %v1672
    %v1674 = vpop.xlane.xlu0 %1673
    %v1675 = vrcp.pop %v1671
    %v1676 = vrcp.pop %v1674
    %v1677 = vmul.f32 %v1666, %v1675
    %v1678 = vmul.f32 %v1668, %v1676
    %1679 = vrot.lane.b32.xlu0 %v1154, 48
    %v1680 = vpop.permute.xlu0 %1679
    %1681 = vrot.lane.b32.xlu0 %v1159, 48
    %v1682 = vpop.permute.xlu0 %1681
    %v1685 = vsel %vm240, %v1677, 0
    %v1688 = vsel %vm240, %v1678, 0
    %v1690 = vsel %vm275, %v1682, 0
    %1692 = vmatprep.subr.mxu0 0.0
    %1693 = vmatpush1.msra.mxu0 %v1680
    %1694 = vmatprep.subr.mxu0 0.0
    %1695 = vmatpush1.msra.mxu0 %v1690
    %1696 = vmatprep.subr.mxu0 0.0
    %1697 = vmatpush1.msra.mxu0 0.0
    %1698 = vmatprep.subr.mxu0 0.0
    %1699 = vmatpush1.msra.mxu0 0.0
    %1700 = vmatprep.subr.mxu0 0.0
    %1701 = vmatpush1.msra.mxu0 0.0
    %1702 = vmatprep.subr.mxu0 0.0
    %1703 = vmatpush1.msra.mxu0 0.0
    %1704 = vmatprep.subr.mxu0 0.0
    %1705 = vmatpush1.msra.mxu0 0.0
    %1706 = vmatprep.subr.mxu0 0.0
    %1707 = vmatpush1.msra.mxu0 0.0
    %1708 = vmatprep.subr.mxu0 0.0
    %1709 = vmatpush1.msra.mxu0 0.0
    %1710 = vmatprep.subr.mxu0 0.0
    %1711 = vmatpush1.msra.mxu0 0.0
    %1712 = vmatprep.subr.mxu0 0.0
    %1713 = vmatpush1.msra.mxu0 0.0
    %1714 = vmatprep.subr.mxu0 0.0
    %1715 = vmatpush1.msra.mxu0 0.0
    %1716 = vmatprep.subr.mxu0 0.0
    %1717 = vmatpush1.msra.mxu0 0.0
    %1718 = vmatprep.subr.mxu0 0.0
    %1719 = vmatpush1.msra.mxu0 0.0
    %1720 = vmatprep.subr.mxu0 0.0
    %1721 = vmatpush1.msra.mxu0 0.0
    %1722 = vmatprep.subr.mxu0 0.0
    %1723 = vmatpush1.msra.mxu0 0.0
    %1724 = vmatprep.subr.mxu0 0.0
    %1725 = vmatpush1.msra.mxu0 0.0
    %1726 = vmatprep.subr.mxu0 0.0
    %1727 = vmatpush1.msra.mxu0 0.0
    %1728 = vmatprep.subr.mxu0 0.0
    %1729 = vmatpush1.msra.mxu0 0.0
    %1730 = vmatprep.subr.mxu0 0.0
    %1731 = vmatpush1.msra.mxu0 0.0
    %1732 = vmatprep.subr.mxu0 0.0
    %1733 = vmatpush1.msra.mxu0 0.0
    %1734 = vmatprep.subr.mxu0 0.0
    %1735 = vmatpush1.msra.mxu0 0.0
    %1736 = vmatprep.subr.mxu0 0.0
    %1737 = vmatpush1.msra.mxu0 0.0
    %1738 = vmatprep.subr.mxu0 0.0
    %1739 = vmatpush1.msra.mxu0 0.0
    %1740 = vmatprep.subr.mxu0 0.0
    %1741 = vmatpush1.msra.mxu0 0.0
    %1742 = vmatprep.subr.mxu0 0.0
    %1743 = vmatpush1.msra.mxu0 0.0
    %1744 = vmatprep.subr.mxu0 0.0
    %1745 = vmatpush1.msra.mxu0 0.0
    %1746 = vmatprep.subr.mxu0 0.0
    %1747 = vmatpush1.msra.mxu0 0.0
    %1748 = vmatprep.subr.mxu0 0.0
    %1749 = vmatpush1.msra.mxu0 0.0
    %1750 = vmatprep.subr.mxu0 0.0
    %1751 = vmatpush1.msra.mxu0 0.0
    %1752 = vmatprep.subr.mxu0 0.0
    %1753 = vmatpush1.msra.mxu0 0.0
    %1754 = vmatprep.subr.mxu0 0.0
    %1755 = vmatpush1.msra.mxu0 0.0
    %1756 = vmatprep.mubr.f32.mxu0 0.0
    %1757 = vmatmul.mubr.f32.gmra.mrb[0].mxu0 %v1685
    %v1758 = vpop.f32.mrb[0].mxu0
    %v1759 = vadd.f32 0.0, %v1758
    %v1760 = vpop.f32.mrb[0].mxu0
    %1761 = vmatprep.mubr.f32.mxu0 0.0
    %1762 = vmatmul.mubr.f32.gmra.mrb[0].mxu0 %v1688
    %v1763 = vpop.f32.mrb[0].mxu0
    %v1764 = vadd.f32 0.0, %v1763
    %v1765 = vpop.f32.mrb[0].mxu0
    %1766 = vdwg.mxu0
    %1767 = vrot.lane.b32.xlu0 %v1162, 104
    %v1768 = vpop.permute.xlu0 %1767
    %1769 = vrot.lane.b32.xlu0 %v1163, 104
    %v1770 = vpop.permute.xlu0 %1769
    %1771 = vrot.lane.b32.xlu0 %v1154, 72
    %v1772 = vpop.permute.xlu0 %1771
    %1773 = vrot.lane.b32.xlu0 %v1159, 72
    %v1774 = vpop.permute.xlu0 %1773
    %v1775 = vsel %vm154, %v1768, 0
    %v1777 = vsel %vm154, %v1770, 0
    %v1779 = vsel %vm154, %v1772, 0
    %v1781 = vsel %vm154, %v1774, 0
    %1783 = vmatprep.subr.mxu0 0.0
    %1784 = vmatpush1.xpose.msra.mxu0 %v1779
    %1785 = vmatprep.subr.mxu0 0.0
    %1786 = vmatpush1.xpose.msra.mxu0 %v1781
    %1787 = vmatprep.subr.mxu0 0.0
    %1788 = vmatpush1.xpose.msra.mxu0 0.0
    %1789 = vmatprep.subr.mxu0 0.0
    %1790 = vmatpush1.xpose.msra.mxu0 0.0
    %1791 = vmatprep.subr.mxu0 0.0
    %1792 = vmatpush1.xpose.msra.mxu0 0.0
    %1793 = vmatprep.subr.mxu0 0.0
    %1794 = vmatpush1.xpose.msra.mxu0 0.0
    %1795 = vmatprep.subr.mxu0 0.0
    %1796 = vmatpush1.xpose.msra.mxu0 0.0
    %1797 = vmatprep.subr.mxu0 0.0
    %1798 = vmatpush1.xpose.msra.mxu0 0.0
    %1799 = vmatprep.subr.mxu0 0.0
    %1800 = vmatpush1.xpose.msra.mxu0 0.0
    %1801 = vmatprep.subr.mxu0 0.0
    %1802 = vmatpush1.xpose.msra.mxu0 0.0
    %1803 = vmatprep.subr.mxu0 0.0
    %1804 = vmatpush1.xpose.msra.mxu0 0.0
    %1805 = vmatprep.subr.mxu0 0.0
    %1806 = vmatpush1.xpose.msra.mxu0 0.0
    %1807 = vmatprep.subr.mxu0 0.0
    %1808 = vmatpush1.xpose.msra.mxu0 0.0
    %1809 = vmatprep.subr.mxu0 0.0
    %1810 = vmatpush1.xpose.msra.mxu0 0.0
    %1811 = vmatprep.subr.mxu0 0.0
    %1812 = vmatpush1.xpose.msra.mxu0 0.0
    %1813 = vmatprep.subr.mxu0 0.0
    %1814 = vmatpush1.xpose.msra.mxu0 0.0
    %1815 = vmatprep.subr.mxu0 0.0
    %1816 = vmatpush1.xpose.msra.mxu0 0.0
    %1817 = vmatprep.subr.mxu0 0.0
    %1818 = vmatpush1.xpose.msra.mxu0 0.0
    %1819 = vmatprep.subr.mxu0 0.0
    %1820 = vmatpush1.xpose.msra.mxu0 0.0
    %1821 = vmatprep.subr.mxu0 0.0
    %1822 = vmatpush1.xpose.msra.mxu0 0.0
    %1823 = vmatprep.subr.mxu0 0.0
    %1824 = vmatpush1.xpose.msra.mxu0 0.0
    %1825 = vmatprep.subr.mxu0 0.0
    %1826 = vmatpush1.xpose.msra.mxu0 0.0
    %1827 = vmatprep.subr.mxu0 0.0
    %1828 = vmatpush1.xpose.msra.mxu0 0.0
    %1829 = vmatprep.subr.mxu0 0.0
    %1830 = vmatpush1.xpose.msra.mxu0 0.0
    %1831 = vmatprep.subr.mxu0 0.0
    %1832 = vmatpush1.xpose.msra.mxu0 0.0
    %1833 = vmatprep.subr.mxu0 0.0
    %1834 = vmatpush1.xpose.msra.mxu0 0.0
    %1835 = vmatprep.subr.mxu0 0.0
    %1836 = vmatpush1.xpose.msra.mxu0 0.0
    %1837 = vmatprep.subr.mxu0 0.0
    %1838 = vmatpush1.xpose.msra.mxu0 0.0
    %1839 = vmatprep.subr.mxu0 0.0
    %1840 = vmatpush1.xpose.msra.mxu0 0.0
    %1841 = vmatprep.subr.mxu0 0.0
    %1842 = vmatpush1.xpose.msra.mxu0 0.0
    %1843 = vmatprep.subr.mxu0 0.0
    %1844 = vmatpush1.xpose.msra.mxu0 0.0
    %1845 = vmatprep.subr.mxu0 0.0
    %1846 = vmatpush1.xpose.msra.mxu0 0.0
    %1847 = vmatprep.mubr.f32.mxu0 0.0
    %1848 = vmatmul.mubr.f32.gmra.mrb[0].mxu0 %v1775
    %v1849 = vpop.f32.mrb[0].mxu0
    %v1850 = vadd.f32 %v54, %v1849
    %v1851 = vpop.f32.mrb[0].mxu0
    %1852 = vmatprep.mubr.f32.mxu0 0.0
    %1853 = vmatmul.mubr.f32.gmra.mrb[0].mxu0 %v1777
    %v1854 = vpop.f32.mrb[0].mxu0
    %v1855 = vadd.f32 %v55, %v1854
    %v1856 = vpop.f32.mrb[0].mxu0
    %1857 = vdwg.mxu0
    %v1858 = vsel %vm240, %v1850, -inf
    %1859 = vmax.xlane.f32.xlu0 %v1858
    %v1860 = vpop.xlane.xlu0 %1859
    %v1861 = vsel %vm244, %v1855, -inf
    %1862 = vmax.xlane.f32.xlu0 %v1861
    %v1863 = vpop.xlane.xlu0 %1862
    %v1864 = vsub.f32 %v1850, %v1860
    %v1865 = vsub.f32 %v1855, %v1863
    %v1866 = vmul.f32 %v1864, 1.442695
    %v1867 = vpow.pop %v1866
    %v1868 = vmul.f32 %v1865, 1.442695
    %v1869 = vpow.pop %v1868
    %v1870 = vsel %vm240, %v1867, 0.0
    %1871 = vadd.xlane.f32.xlu0 %v1870
    %v1872 = vpop.xlane.xlu0 %1871
    %v1873 = vsel %vm244, %v1869, 0.0
    %1874 = vadd.xlane.f32.xlu0 %v1873
    %v1875 = vpop.xlane.xlu0 %1874
    %v1876 = vrcp.pop %v1872
    %v1877 = vrcp.pop %v1875
    %v1878 = vmul.f32 %v1867, %v1876
    %v1879 = vmul.f32 %v1869, %v1877
    %1880 = vrot.lane.b32.xlu0 %v1154, 40
    %v1881 = vpop.permute.xlu0 %1880
    %1882 = vrot.lane.b32.xlu0 %v1159, 40
    %v1883 = vpop.permute.xlu0 %1882
    %v1886 = vsel %vm240, %v1878, 0
    %v1889 = vsel %vm240, %v1879, 0
    %v1891 = vsel %vm275, %v1883, 0
    %1893 = vmatprep.subr.mxu0 0.0
    %1894 = vmatpush1.msra.mxu0 %v1881
    %1895 = vmatprep.subr.mxu0 0.0
    %1896 = vmatpush1.msra.mxu0 %v1891
    %1897 = vmatprep.subr.mxu0 0.0
    %1898 = vmatpush1.msra.mxu0 0.0
    %1899 = vmatprep.subr.mxu0 0.0
    %1900 = vmatpush1.msra.mxu0 0.0
    %1901 = vmatprep.subr.mxu0 0.0
    %1902 = vmatpush1.msra.mxu0 0.0
    %1903 = vmatprep.subr.mxu0 0.0
    %1904 = vmatpush1.msra.mxu0 0.0
    %1905 = vmatprep.subr.mxu0 0.0
    %1906 = vmatpush1.msra.mxu0 0.0
    %1907 = vmatprep.subr.mxu0 0.0
    %1908 = vmatpush1.msra.mxu0 0.0
    %1909 = vmatprep.subr.mxu0 0.0
    %1910 = vmatpush1.msra.mxu0 0.0
    %1911 = vmatprep.subr.mxu0 0.0
    %1912 = vmatpush1.msra.mxu0 0.0
    %1913 = vmatprep.subr.mxu0 0.0
    %1914 = vmatpush1.msra.mxu0 0.0
    %1915 = vmatprep.subr.mxu0 0.0
    %1916 = vmatpush1.msra.mxu0 0.0
    %1917 = vmatprep.subr.mxu0 0.0
    %1918 = vmatpush1.msra.mxu0 0.0
    %1919 = vmatprep.subr.mxu0 0.0
    %1920 = vmatpush1.msra.mxu0 0.0
    %1921 = vmatprep.subr.mxu0 0.0
    %1922 = vmatpush1.msra.mxu0 0.0
    %1923 = vmatprep.subr.mxu0 0.0
    %1924 = vmatpush1.msra.mxu0 0.0
    %1925 = vmatprep.subr.mxu0 0.0
    %1926 = vmatpush1.msra.mxu0 0.0
    %1927 = vmatprep.subr.mxu0 0.0
    %1928 = vmatpush1.msra.mxu0 0.0
    %1929 = vmatprep.subr.mxu0 0.0
    %1930 = vmatpush1.msra.mxu0 0.0
    %1931 = vmatprep.subr.mxu0 0.0
    %1932 = vmatpush1.msra.mxu0 0.0
    %1933 = vmatprep.subr.mxu0 0.0
    %1934 = vmatpush1.msra.mxu0 0.0
    %1935 = vmatprep.subr.mxu0 0.0
    %1936 = vmatpush1.msra.mxu0 0.0
    %1937 = vmatprep.subr.mxu0 0.0
    %1938 = vmatpush1.msra.mxu0 0.0
    %1939 = vmatprep.subr.mxu0 0.0
    %1940 = vmatpush1.msra.mxu0 0.0
    %1941 = vmatprep.subr.mxu0 0.0
    %1942 = vmatpush1.msra.mxu0 0.0
    %1943 = vmatprep.subr.mxu0 0.0
    %1944 = vmatpush1.msra.mxu0 0.0
    %1945 = vmatprep.subr.mxu0 0.0
    %1946 = vmatpush1.msra.mxu0 0.0
    %1947 = vmatprep.subr.mxu0 0.0
    %1948 = vmatpush1.msra.mxu0 0.0
    %1949 = vmatprep.subr.mxu0 0.0
    %1950 = vmatpush1.msra.mxu0 0.0
    %1951 = vmatprep.subr.mxu0 0.0
    %1952 = vmatpush1.msra.mxu0 0.0
    %1953 = vmatprep.subr.mxu0 0.0
    %1954 = vmatpush1.msra.mxu0 0.0
    %1955 = vmatprep.subr.mxu0 0.0
    %1956 = vmatpush1.msra.mxu0 0.0
    %1957 = vmatprep.mubr.f32.mxu0 0.0
    %1958 = vmatmul.mubr.f32.gmra.mrb[0].mxu0 %v1886
    %v1959 = vpop.f32.mrb[0].mxu0
    %v1960 = vadd.f32 0.0, %v1959
    %v1961 = vpop.f32.mrb[0].mxu0
    %1962 = vmatprep.mubr.f32.mxu0 0.0
    %1963 = vmatmul.mubr.f32.gmra.mrb[0].mxu0 %v1889
    %v1964 = vpop.f32.mrb[0].mxu0
    %v1965 = vadd.f32 0.0, %v1964
    %v1966 = vpop.f32.mrb[0].mxu0
    %1967 = vdwg.mxu0
    %1970 = vrot.lane.b32.xlu0 %v1558, 8
    %v1971 = vpop.permute.xlu0 %1970
    %1972 = vrot.lane.b32.xlu0 %v1563, 8
    %v1973 = vpop.permute.xlu0 %1972
    %1978 = vrot.lane.b32.xlu0 %v1759, 16
    %v1979 = vpop.permute.xlu0 %1978
    %1980 = vrot.lane.b32.xlu0 %v1764, 16
    %v1981 = vpop.permute.xlu0 %1980
    %1986 = vrot.lane.b32.xlu0 %v1960, 24
    %v1987 = vpop.permute.xlu0 %1986
    %1988 = vrot.lane.b32.xlu0 %v1965, 24
    %v1989 = vpop.permute.xlu0 %1988
    %v1992 = vsel %vm154, %v1357, %v1971
    %v1993 = vsel %vm154, %v1362, %v1973
    %v1994 = vsel %vm982, %v1992, %v1979
    %v1995 = vsel %vm982, %v1993, %v1981
    %v1996 = vsel %vm985, %v1994, %v1987
    %v1997 = vsel %vm985, %v1995, %v1989
    %v1999 = vsel %vm64, %v1996, 0
    %v2002 = vsel %vm64, %v1997, 0
    %2004 = vmatprep.subr.mxu0 0.0
    %2005 = vmatpush1.msra.mxu0 %v39
    %2006 = vmatprep.subr.mxu0 0.0
    %2007 = vmatpush1.msra.mxu0 %v40
    %2008 = vmatprep.subr.mxu0 0.0
    %2009 = vmatpush1.msra.mxu0 %v41
    %2010 = vmatprep.subr.mxu0 0.0
    %2011 = vmatpush1.msra.mxu0 %v42
    %2012 = vmatprep.subr.mxu0 0.0
    %2013 = vmatpush1.msra.mxu0 0.0
    %2014 = vmatprep.subr.mxu0 0.0
    %2015 = vmatpush1.msra.mxu0 0.0
    %2016 = vmatprep.subr.mxu0 0.0
    %2017 = vmatpush1.msra.mxu0 0.0
    %2018 = vmatprep.subr.mxu0 0.0
    %2019 = vmatpush1.msra.mxu0 0.0
    %2020 = vmatprep.subr.mxu0 0.0
    %2021 = vmatpush1.msra.mxu0 0.0
    %2022 = vmatprep.subr.mxu0 0.0
    %2023 = vmatpush1.msra.mxu0 0.0
    %2024 = vmatprep.subr.mxu0 0.0
    %2025 = vmatpush1.msra.mxu0 0.0
    %2026 = vmatprep.subr.mxu0 0.0
    %2027 = vmatpush1.msra.mxu0 0.0
    %2028 = vmatprep.subr.mxu0 0.0
    %2029 = vmatpush1.msra.mxu0 0.0
    %2030 = vmatprep.subr.mxu0 0.0
    %2031 = vmatpush1.msra.mxu0 0.0
    %2032 = vmatprep.subr.mxu0 0.0
    %2033 = vmatpush1.msra.mxu0 0.0
    %2034 = vmatprep.subr.mxu0 0.0
    %2035 = vmatpush1.msra.mxu0 0.0
    %2036 = vmatprep.subr.mxu0 0.0
    %2037 = vmatpush1.msra.mxu0 0.0
    %2038 = vmatprep.subr.mxu0 0.0
    %2039 = vmatpush1.msra.mxu0 0.0
    %2040 = vmatprep.subr.mxu0 0.0
    %2041 = vmatpush1.msra.mxu0 0.0
    %2042 = vmatprep.subr.mxu0 0.0
    %2043 = vmatpush1.msra.mxu0 0.0
    %2044 = vmatprep.subr.mxu0 0.0
    %2045 = vmatpush1.msra.mxu0 0.0
    %2046 = vmatprep.subr.mxu0 0.0
    %2047 = vmatpush1.msra.mxu0 0.0
    %2048 = vmatprep.subr.mxu0 0.0
    %2049 = vmatpush1.msra.mxu0 0.0
    %2050 = vmatprep.subr.mxu0 0.0
    %2051 = vmatpush1.msra.mxu0 0.0
    %2052 = vmatprep.subr.mxu0 0.0
    %2053 = vmatpush1.msra.mxu0 0.0
    %2054 = vmatprep.subr.mxu0 0.0
    %2055 = vmatpush1.msra.mxu0 0.0
    %2056 = vmatprep.subr.mxu0 0.0
    %2057 = vmatpush1.msra.mxu0 0.0
    %2058 = vmatprep.subr.mxu0 0.0
    %2059 = vmatpush1.msra.mxu0 0.0
    %2060 = vmatprep.subr.mxu0 0.0
    %2061 = vmatpush1.msra.mxu0 0.0
    %2062 = vmatprep.subr.mxu0 0.0
    %2063 = vmatpush1.msra.mxu0 0.0
    %2064 = vmatprep.subr.mxu0 0.0
    %2065 = vmatpush1.msra.mxu0 0.0
    %2066 = vmatprep.subr.mxu0 0.0
    %2067 = vmatpush1.msra.mxu0 0.0
    %2068 = vmatprep.mubr.f32.mxu0 0.0
    %2069 = vmatmul.mubr.f32.gmra.mrb[0].mxu0 %v1999
    %v2070 = vpop.f32.mrb[0].mxu0
    %v2071 = vadd.f32 %v992, %v2070
    %v2072 = vpop.f32.mrb[0].mxu0
    %2073 = vmatprep.mubr.f32.mxu0 0.0
    %2074 = vmatmul.mubr.f32.gmra.mrb[0].mxu0 %v2002
    %v2075 = vpop.f32.mrb[0].mxu0
    %v2076 = vadd.f32 %v992, %v2075
    %v2077 = vpop.f32.mrb[0].mxu0
    %2078 = vdwg.mxu0
    %s2079 = scalar_lea.vmem %s5, 16
    %2080 = vst.msk [vmem:[%s2079] sm:$0xff] %vm64, %v2071
    %2081 = vst.msk [vmem:[%s2079 + $0x8] sm:$0x1] %vm1076, %v2076
    // Predicated region
    $region26: #{tpu_custom_call.1} parent=1 // pred_check
      _
    $region27: #{tpu_custom_call.1} parent=1 // pred_check_branch
      %2083 = sbr.rel (0) target = $region29
    $region28: #{tpu_custom_call.1} parent=1 // pred_region
      _
    $region29: #{tpu_custom_call.1} parent=1 // pred_fallthru
      _
    // Predicated region
    $region30: #{tpu_custom_call.1} parent=1 // pred_check
      _
    $region31: #{tpu_custom_call.1} parent=1 // pred_check_branch
      %2085 = sbr.rel (0) target = $region33
    $region32: #{tpu_custom_call.1} parent=1 // pred_region
      _
    $region33: #{tpu_custom_call.1} parent=1 // pred_fallthru
      _
    %2086 = vsyncpa [#allocation3], 1

</llo_original>
